<compile_context>
chip_gen: v7x
topology: tpu7x:2x2x1
jax: 0.10.0
libtpu: 0.0.40
codegen_flags: <defaults>
</compile_context>

<pallas_src>
import jax
import jax.numpy as jnp
from jax.experimental import pallas as pl
from jax.experimental.pallas import tpu as pltpu


# ----------------------------- Pallas kernel --------------------------------
def vneumf_kernel(
    # batch-tiled inputs: gathered embeddings + poster features
    u_mf_ref, i_mf_ref, u_mlp_ref, i_mlp_ref, u_v_ref, poster_ref,
    # fc_embedding: Linear(2048,128) -> ReLU -> Linear(128, latent_dim_v)
    we1_ref, be1_ref, we2_ref, be2_ref,
    # fc_layers (MLP tower); first linear split for the concat input
    w1u_ref, w1i_ref, b1_ref, w2_ref, b2_ref, w3_ref, b3_ref,
    # fc_layers_v (visual tower); first linear split for the concat input
    wv1u_ref, wv1i_ref, bv1_ref, wv2_ref, bv2_ref,
    # affine_output, split over [mlp_vector, mf_vector, v_vector] as row vecs
    wa_mlp_ref, wa_mf_ref, wa_v_ref, ba_ref,
    # output
    out_ref,
):
    f32 = jnp.float32

    # ---- poster -> fc_embedding (dominant matmul) ----------------------------
    # Cast to the stored weight dtype (bf16 by default) *in VMEM*: no extra HBM
    # pass over the poster; bf16 x bf16 on the MXU with f32 accumulation.
    we1 = we1_ref[...]
    poster = poster_ref[...].astype(we1.dtype)
    h = jnp.dot(poster, we1, preferred_element_type=f32) + be1_ref[...]
    h = jnp.maximum(h, 0.0)
    item_v = jnp.dot(h, we2_ref[...], preferred_element_type=f32) + be2_ref[...]

    # ---- GMF branch: elementwise product -------------------------------------
    mf_vec = u_mf_ref[...] * i_mf_ref[...]

    # ---- MLP tower: cat(u_mlp, i_mlp) -> [Linear, Dropout(id), ReLU] * 3 ------
    m = (jnp.dot(u_mlp_ref[...], w1u_ref[...], preferred_element_type=f32)
         + jnp.dot(i_mlp_ref[...], w1i_ref[...], preferred_element_type=f32)
         + b1_ref[...])
    m = jnp.maximum(m, 0.0)
    m = jnp.maximum(jnp.dot(m, w2_ref[...], preferred_element_type=f32) + b2_ref[...], 0.0)
    m = jnp.maximum(jnp.dot(m, w3_ref[...], preferred_element_type=f32) + b3_ref[...], 0.0)

    # ---- visual tower: cat(u_v, item_v) -> [Linear, Dropout(id), ReLU] * 2 ----
    v = (jnp.dot(u_v_ref[...], wv1u_ref[...], preferred_element_type=f32)
         + jnp.dot(item_v, wv1i_ref[...], preferred_element_type=f32)
         + bv1_ref[...])
    v = jnp.maximum(v, 0.0)
    v = jnp.maximum(jnp.dot(v, wv2_ref[...], preferred_element_type=f32) + bv2_ref[...], 0.0)

    # ---- affine_output over cat(mlp, mf, v): N=1 head on VPU+XLU, not MXU -----
    logits = (jnp.sum(m * wa_mlp_ref[...], axis=-1, keepdims=True)
              + jnp.sum(mf_vec * wa_mf_ref[...], axis=-1, keepdims=True)
              + jnp.sum(v * wa_v_ref[...], axis=-1, keepdims=True)
              + ba_ref[...])
    out_ref[...] = 1.0 / (1.0 + jnp.exp(-logits))


# ------------------------------- helpers --------------------------------------
def _round_up(x, m):
    return (x + m - 1) // m * m


def _cdiv(a, b):
    return -(-a // b)


def prepare_kernel_weights(params, *, matmul_dtype=jnp.bfloat16):
    """One-time weight prep (cast / split / transpose) hoisted out of the
    per-call path.  Call once and pass the result to vneumf_forward()."""
    p = params
    d_mf = p["emb_user_mf"].shape[1]
    d_mlp = p["emb_user_mlp"].shape[1]
    d_v = p["emb_user_v"].shape[1]
    d_mlp_out = p["fc_w3"].shape[1]

    w1 = p["fc_w1"]          # (2*d_mlp, layers[1])
    wv1 = p["fcv_w1"]        # (2*d_v, layers_v[1])
    wa = p["affine_w"]       # (layers[-1] + d_mf + layers_v[-1], 1)

    return (
        # fc_embedding (dominant matmul weight stored at the compute dtype)
        p["fce_w1"].astype(matmul_dtype), p["fce_b1"], p["fce_w2"], p["fce_b2"],
        # fc_layers; first linear split so the kernel never concatenates lanes
        w1[:d_mlp], w1[d_mlp:], p["fc_b1"],
        p["fc_w2"], p["fc_b2"], p["fc_w3"], p["fc_b3"],
        # fc_layers_v
        wv1[:d_v], wv1[d_v:], p["fcv_b1"], p["fcv_w2"], p["fcv_b2"],
        # affine_output split + transposed to (1, d) broadcast rows (VPU head)
        wa[:d_mlp_out].T,
        wa[d_mlp_out:d_mlp_out + d_mf].T,
        wa[d_mlp_out + d_mf:].T,
        p["affine_b"],
    )


# ------------------------------- wrapper ---------------------------------------
def vneumf_forward(user_indices, item_indices, poster_embeddings, params,
                   *, kernel_weights=None, tile_b=1024,
                   matmul_dtype=jnp.bfloat16):
    p = params
    B = int(user_indices.shape[0])

    if kernel_weights is None:
        kernel_weights = prepare_kernel_weights(p, matmul_dtype=matmul_dtype)

    # Embedding lookups (data-dependent gathers) stay in plain JAX glue.
    u_mf = p["emb_user_mf"][user_indices]
    i_mf = p["emb_item_mf"][item_indices]
    u_mlp = p["emb_user_mlp"][user_indices]
    i_mlp = p["emb_item_mlp"][item_indices]
    u_v = p["emb_user_v"][user_indices]

    # Poster is passed as-is (no pad, no cast): dominant HBM stream is read once.
    batch_inputs = [u_mf, i_mf, u_mlp, i_mlp, u_v, poster_embeddings]

    # ---- batch tiling: no padding; Pallas masks the trailing partial block ----
    tile_b = max(16, min(int(tile_b), _round_up(B, 16)))
    tile_b = _round_up(tile_b, 16)
    # Keep >= 2 grid steps when possible so v7x megacore can shard the batch axis.
    if B > 256 and _cdiv(B, tile_b) < 2:
        tile_b = _round_up(_cdiv(B, 2), 16)
    num_tiles = _cdiv(B, tile_b)

    def batch_spec(x):
        return pl.BlockSpec((tile_b, int(x.shape[1])), lambda i: (i, 0))

    def resident_spec(w):
        # Full-array block, constant index map -> stays VMEM-resident across grid.
        return pl.BlockSpec(tuple(int(s) for s in w.shape), lambda i: (0, 0))

    in_specs = ([batch_spec(x) for x in batch_inputs]
                + [resident_spec(w) for w in kernel_weights])
    out_spec = pl.BlockSpec((tile_b, 1), lambda i: (i, 0))

    # Advisory cost estimate (helps XLA schedule the surrounding gathers).
    kw = kernel_weights
    d_v = kw[2].shape[1]
    d_mlp = kw[4].shape[0]
    n1, n2, n3 = kw[4].shape[1], kw[7].shape[1], kw[9].shape[1]
    nv1, nv2 = kw[11].shape[1], kw[14].shape[1]
    d_mf = kw[17].shape[1]
    flops_per_row = 2 * (2048 * 128 + 128 * d_v
                         + 2 * d_mlp * n1 + n1 * n2 + n2 * n3
                         + 2 * d_v * nv1 + nv1 * nv2
                         + (n3 + d_mf + nv2))
    bytes_accessed = (sum(int(x.size) * x.dtype.itemsize for x in batch_inputs)
                      + sum(int(w.size) * w.dtype.itemsize for w in kw)
                      + B * 4)
    cost = pl.CostEstimate(flops=B * flops_per_row,
                           transcendentals=B,
                           bytes_accessed=int(bytes_accessed))

    out = pl.pallas_call(
        vneumf_kernel,
        out_shape=jax.ShapeDtypeStruct((B, 1), jnp.float32),
        grid=(num_tiles,),
        in_specs=in_specs,
        out_specs=out_spec,
        compiler_params=pltpu.CompilerParams(
            dimension_semantics=("parallel",),
            # Explicit limit: v5e's scoped default (16 MiB) is too small for a
            # 1024-row double-buffered f32 poster tile; 40 MiB also stays well
            # under v7x's 64 MiB physical VMEM.  For tile_b >= 2048 keep the
            # poster table in bf16 upstream (2 B/elem) to fit comfortably.
            vmem_limit_bytes=40 * 1024 * 1024,
        ),
        cost_estimate=cost,
    )(*batch_inputs, *kernel_weights)
    return out


# --------------------------- parameter init ------------------------------------
def init_params(key, *, num_users, num_items, d_mf, d_mlp, d_v, layers, layers_v):
    keys = jax.random.split(key, 32)
    k = iter(keys)

    def w(shape, scale=0.05):
        return (scale * jax.random.normal(next(k), shape)).astype(jnp.float32)

    def b(n):
        # biases as (1, n) rows for clean TPU layout / broadcasting
        return (0.01 * jax.random.normal(next(k), (1, n))).astype(jnp.float32)

    params = {
        "emb_user_mlp": w((num_users, d_mlp)),
        "emb_item_mlp": w((num_items, d_mlp)),
        "emb_user_mf": w((num_users, d_mf)),
        "emb_item_mf": w((num_items, d_mf)),
        "emb_user_v": w((num_users, d_v)),
        # fc_embedding: Linear(2048, 128), ReLU, Linear(128, d_v)
        "fce_w1": w((2048, 128), 0.02), "fce_b1": b(128),
        "fce_w2": w((128, d_v)), "fce_b2": b(d_v),
        # fc_layers: layers = [l0, l1, l2, l3]
        "fc_w1": w((layers[0], layers[1])), "fc_b1": b(layers[1]),
        "fc_w2": w((layers[1], layers[2])), "fc_b2": b(layers[2]),
        "fc_w3": w((layers[2], layers[3])), "fc_b3": b(layers[3]),
        # fc_layers_v: layers_v = [v0, v1, v2]
        "fcv_w1": w((layers_v[0], layers_v[1])), "fcv_b1": b(layers_v[1]),
        "fcv_w2": w((layers_v[1], layers_v[2])), "fcv_b2": b(layers_v[2]),
        # affine_output: (layers[-1] + d_mf + layers_v[-1]) -> 1
        "affine_w": w((layers[3] + d_mf + layers_v[2], 1)),
        "affine_b": b(1),
    }
    return params


# --------------------------- pure-JAX reference ---------------------------------
def vneumf_reference(user_indices, item_indices, poster, p):
    poster = poster.astype(jnp.float32)
    u_mf = p["emb_user_mf"][user_indices]
    i_mf = p["emb_item_mf"][item_indices]
    u_mlp = p["emb_user_mlp"][user_indices]
    i_mlp = p["emb_item_mlp"][item_indices]
    u_v = p["emb_user_v"][user_indices]

    h = jnp.maximum(poster @ p["fce_w1"] + p["fce_b1"], 0.0)
    item_v = h @ p["fce_w2"] + p["fce_b2"]

    mf_vec = u_mf * i_mf
    m = jnp.concatenate([u_mlp, i_mlp], axis=-1)
    m = jnp.maximum(m @ p["fc_w1"] + p["fc_b1"], 0.0)
    m = jnp.maximum(m @ p["fc_w2"] + p["fc_b2"], 0.0)
    m = jnp.maximum(m @ p["fc_w3"] + p["fc_b3"], 0.0)
    v = jnp.concatenate([u_v, item_v], axis=-1)
    v = jnp.maximum(v @ p["fcv_w1"] + p["fcv_b1"], 0.0)
    v = jnp.maximum(v @ p["fcv_w2"] + p["fcv_b2"], 0.0)
    vec = jnp.concatenate([m, mf_vec, v], axis=-1)
    logits = vec @ p["affine_w"] + p["affine_b"]
    return jax.nn.sigmoid(logits)


if __name__ == "__main__":
    # Small, self-consistent config (poster feature dim 2048 is fixed by the module).
    num_users, num_items = 32, 48
    d_mf, d_mlp, d_v = 8, 16, 16
    layers = [2 * d_mlp, 64, 32, 16]     # layers[0] must equal 2 * latent_dim_mlp
    layers_v = [2 * d_v, 32, 16]         # layers_v[0] must equal 2 * latent_dim_v

    key = jax.random.PRNGKey(0)
    k_param, k_data = jax.random.split(key)
    params = init_params(k_param, num_users=num_users, num_items=num_items,
                         d_mf=d_mf, d_mlp=d_mlp, d_v=d_v,
                         layers=layers, layers_v=layers_v)

    # One-time weight prep (cast / split / transpose hoisted out of per-call path).
    kw_f32 = prepare_kernel_weights(params, matmul_dtype=jnp.float32)
    kw_bf16 = prepare_kernel_weights(params, matmul_dtype=jnp.bfloat16)

    def make_batch(k, B, poster_dtype=jnp.float32):
        k_u, k_i, k_p = jax.random.split(k, 3)
        user_idx = jax.random.randint(k_u, (B,), 0, num_users)
        item_idx = jax.random.randint(k_i, (B,), 0, num_items)
        poster = jax.random.normal(k_p, (B, 2048)).astype(poster_dtype)
        return user_idx, item_idx, poster

    k1, k2, k3 = jax.random.split(k_data, 3)

    # 1) f32 weights + f32 poster: exact-ish check against the reference.
    u, i, po = make_batch(k1, 16)
    out = jax.block_until_ready(
        vneumf_forward(u, i, po, params, kernel_weights=kw_f32, tile_b=16))
    ref = jax.block_until_ready(vneumf_reference(u, i, po, params))
    assert out.shape == (16, 1)
    assert jnp.allclose(out, ref, atol=1e-5, rtol=1e-5), float(jnp.max(jnp.abs(out - ref)))

    # 2) Poster stored upstream in bf16 (2 B/elem dominant stream) + bf16 fce_w1;
    #    batch not a tile multiple -> multi-step grid with masked trailing block.
    Bm = 520
    um, im, pm = make_batch(k2, Bm, poster_dtype=jnp.bfloat16)
    outm = jax.block_until_ready(
        vneumf_forward(um, im, pm, params, kernel_weights=kw_bf16, tile_b=256))
    refm = jax.block_until_ready(vneumf_reference(um, im, pm, params))
    assert outm.shape == (Bm, 1)
    assert jnp.allclose(outm, refm, atol=1e-2, rtol=1e-2), (
        float(jnp.max(jnp.abs(outm - refm))))

    # 3) f32 poster cast to bf16 *inside* the kernel (no wrapper pad/cast pass),
    #    odd batch size exercising partial-block masking with default tiling.
    Bs = 72
    us, is_, ps = make_batch(k3, Bs)
    outs = jax.block_until_ready(
        vneumf_forward(us, is_, ps, params, kernel_weights=kw_bf16))
    refs = jax.block_until_ready(vneumf_reference(us, is_, ps, params))
    assert outs.shape == (Bs, 1)
    assert jnp.allclose(outs, refs, atol=1e-2, rtol=1e-2), (
        float(jnp.max(jnp.abs(outs - refs))))

    print("KERNEL_OK")
</pallas_src>

<mosaic_0001>
module attributes {stable_mosaic.version = 11 : i64} {
  func.func @vneumf_kernel(%arg0: i32, %arg1: memref<16x8xf32, #tpu.memory_space<vmem>>, %arg2: memref<16x8xf32, #tpu.memory_space<vmem>>, %arg3: memref<16x16xf32, #tpu.memory_space<vmem>>, %arg4: memref<16x16xf32, #tpu.memory_space<vmem>>, %arg5: memref<16x16xf32, #tpu.memory_space<vmem>>, %arg6: memref<16x2048xf32, #tpu.memory_space<vmem>>, %arg7: memref<2048x128xf32, #tpu.memory_space<vmem>>, %arg8: memref<1x128xf32, #tpu.memory_space<vmem>>, %arg9: memref<128x16xf32, #tpu.memory_space<vmem>>, %arg10: memref<1x16xf32, #tpu.memory_space<vmem>>, %arg11: memref<16x64xf32, #tpu.memory_space<vmem>>, %arg12: memref<16x64xf32, #tpu.memory_space<vmem>>, %arg13: memref<1x64xf32, #tpu.memory_space<vmem>>, %arg14: memref<64x32xf32, #tpu.memory_space<vmem>>, %arg15: memref<1x32xf32, #tpu.memory_space<vmem>>, %arg16: memref<32x16xf32, #tpu.memory_space<vmem>>, %arg17: memref<1x16xf32, #tpu.memory_space<vmem>>, %arg18: memref<16x32xf32, #tpu.memory_space<vmem>>, %arg19: memref<16x32xf32, #tpu.memory_space<vmem>>, %arg20: memref<1x32xf32, #tpu.memory_space<vmem>>, %arg21: memref<32x16xf32, #tpu.memory_space<vmem>>, %arg22: memref<1x16xf32, #tpu.memory_space<vmem>>, %arg23: memref<1x16xf32, #tpu.memory_space<vmem>>, %arg24: memref<1x8xf32, #tpu.memory_space<vmem>>, %arg25: memref<1x16xf32, #tpu.memory_space<vmem>>, %arg26: memref<1x1xf32, #tpu.memory_space<vmem>>, %arg27: memref<16x1xf32, #tpu.memory_space<vmem>>) attributes {dimension_semantics = [#tpu.dimension_semantics<parallel>], iteration_bounds = array<i64: 1>, scalar_prefetch = 0 : i64, scratch_operands = 0 : i64, tpu.core_type = #tpu.core_type<tc>, window_params = [{transform_indices = @transform_0, window_bounds = array<i64: 16, 8>}, {transform_indices = @transform_1, window_bounds = array<i64: 16, 8>}, {transform_indices = @transform_2, window_bounds = array<i64: 16, 16>}, {transform_indices = @transform_3, window_bounds = array<i64: 16, 16>}, {transform_indices = @transform_4, window_bounds = array<i64: 16, 16>}, {transform_indices = @transform_5, window_bounds = array<i64: 16, 2048>}, {pipeline_mode = #tpu.pipeline_mode<synchronous>, transform_indices = @transform_6, window_bounds = array<i64: 2048, 128>}, {pipeline_mode = #tpu.pipeline_mode<synchronous>, transform_indices = @transform_7, window_bounds = array<i64: 1, 128>}, {pipeline_mode = #tpu.pipeline_mode<synchronous>, transform_indices = @transform_8, window_bounds = array<i64: 128, 16>}, {pipeline_mode = #tpu.pipeline_mode<synchronous>, transform_indices = @transform_9, window_bounds = array<i64: 1, 16>}, {pipeline_mode = #tpu.pipeline_mode<synchronous>, transform_indices = @transform_10, window_bounds = array<i64: 16, 64>}, {pipeline_mode = #tpu.pipeline_mode<synchronous>, transform_indices = @transform_11, window_bounds = array<i64: 16, 64>}, {pipeline_mode = #tpu.pipeline_mode<synchronous>, transform_indices = @transform_12, window_bounds = array<i64: 1, 64>}, {pipeline_mode = #tpu.pipeline_mode<synchronous>, transform_indices = @transform_13, window_bounds = array<i64: 64, 32>}, {pipeline_mode = #tpu.pipeline_mode<synchronous>, transform_indices = @transform_14, window_bounds = array<i64: 1, 32>}, {pipeline_mode = #tpu.pipeline_mode<synchronous>, transform_indices = @transform_15, window_bounds = array<i64: 32, 16>}, {pipeline_mode = #tpu.pipeline_mode<synchronous>, transform_indices = @transform_16, window_bounds = array<i64: 1, 16>}, {pipeline_mode = #tpu.pipeline_mode<synchronous>, transform_indices = @transform_17, window_bounds = array<i64: 16, 32>}, {pipeline_mode = #tpu.pipeline_mode<synchronous>, transform_indices = @transform_18, window_bounds = array<i64: 16, 32>}, {pipeline_mode = #tpu.pipeline_mode<synchronous>, transform_indices = @transform_19, window_bounds = array<i64: 1, 32>}, {pipeline_mode = #tpu.pipeline_mode<synchronous>, transform_indices = @transform_20, window_bounds = array<i64: 32, 16>}, {pipeline_mode = #tpu.pipeline_mode<synchronous>, transform_indices = @transform_21, window_bounds = array<i64: 1, 16>}, {pipeline_mode = #tpu.pipeline_mode<synchronous>, transform_indices = @transform_22, window_bounds = array<i64: 1, 16>}, {pipeline_mode = #tpu.pipeline_mode<synchronous>, transform_indices = @transform_23, window_bounds = array<i64: 1, 8>}, {pipeline_mode = #tpu.pipeline_mode<synchronous>, transform_indices = @transform_24, window_bounds = array<i64: 1, 16>}, {pipeline_mode = #tpu.pipeline_mode<synchronous>, transform_indices = @transform_25, window_bounds = array<i64: 1, 1>}, {transform_indices = @transform_26, window_bounds = array<i64: 16, 1>}]} {
    %c0 = arith.constant 0 : index
    %c0_0 = arith.constant 0 : index
    %0 = vector.load %arg7[%c0, %c0_0] : memref<2048x128xf32, #tpu.memory_space<vmem>>, vector<2048x128xf32>
    %c0_1 = arith.constant 0 : index
    %c0_2 = arith.constant 0 : index
    %1 = vector.load %arg6[%c0_1, %c0_2] : memref<16x2048xf32, #tpu.memory_space<vmem>>, vector<16x2048xf32>
    %cst = arith.constant dense<0.000000e+00> : vector<16x128xf32>
    %2 = tpu.matmul %1, %0, %cst {dimension_numbers = #tpu.dot_dimension_numbers<[1], [0], [0], [1], [0, 0, 1, 1], [], []>} : vector<16x2048xf32>, vector<2048x128xf32>, vector<16x128xf32> -> vector<16x128xf32>
    %c0_3 = arith.constant 0 : index
    %c0_4 = arith.constant 0 : index
    %3 = vector.load %arg8[%c0_3, %c0_4] : memref<1x128xf32, #tpu.memory_space<vmem>>, vector<1x128xf32>
    %4 = vector.broadcast %3 : vector<1x128xf32> to vector<16x128xf32>
    %5 = arith.addf %2, %4 : vector<16x128xf32>
    %cst_5 = arith.constant 0.000000e+00 : f32
    %6 = vector.broadcast %cst_5 : f32 to vector<16x128xf32>
    %7 = arith.maximumf %5, %6 : vector<16x128xf32>
    %c0_6 = arith.constant 0 : index
    %c0_7 = arith.constant 0 : index
    %8 = vector.load %arg9[%c0_6, %c0_7] : memref<128x16xf32, #tpu.memory_space<vmem>>, vector<128x16xf32>
    %cst_8 = arith.constant dense<0.000000e+00> : vector<16x16xf32>
    %9 = tpu.matmul %7, %8, %cst_8 {dimension_numbers = #tpu.dot_dimension_numbers<[1], [0], [0], [1], [0, 0, 1, 1], [], []>} : vector<16x128xf32>, vector<128x16xf32>, vector<16x16xf32> -> vector<16x16xf32>
    %c0_9 = arith.constant 0 : index
    %c0_10 = arith.constant 0 : index
    %10 = vector.load %arg10[%c0_9, %c0_10] : memref<1x16xf32, #tpu.memory_space<vmem>>, vector<1x16xf32>
    %11 = vector.broadcast %10 : vector<1x16xf32> to vector<16x16xf32>
    %12 = arith.addf %9, %11 : vector<16x16xf32>
    %c0_11 = arith.constant 0 : index
    %c0_12 = arith.constant 0 : index
    %13 = vector.load %arg1[%c0_11, %c0_12] : memref<16x8xf32, #tpu.memory_space<vmem>>, vector<16x8xf32>
    %c0_13 = arith.constant 0 : index
    %c0_14 = arith.constant 0 : index
    %14 = vector.load %arg2[%c0_13, %c0_14] : memref<16x8xf32, #tpu.memory_space<vmem>>, vector<16x8xf32>
    %15 = arith.mulf %13, %14 : vector<16x8xf32>
    %c0_15 = arith.constant 0 : index
    %c0_16 = arith.constant 0 : index
    %16 = vector.load %arg3[%c0_15, %c0_16] : memref<16x16xf32, #tpu.memory_space<vmem>>, vector<16x16xf32>
    %c0_17 = arith.constant 0 : index
    %c0_18 = arith.constant 0 : index
    %17 = vector.load %arg11[%c0_17, %c0_18] : memref<16x64xf32, #tpu.memory_space<vmem>>, vector<16x64xf32>
    %cst_19 = arith.constant dense<0.000000e+00> : vector<16x64xf32>
    %18 = tpu.matmul %16, %17, %cst_19 {dimension_numbers = #tpu.dot_dimension_numbers<[1], [0], [0], [1], [0, 0, 1, 1], [], []>} : vector<16x16xf32>, vector<16x64xf32>, vector<16x64xf32> -> vector<16x64xf32>
    %c0_20 = arith.constant 0 : index
    %c0_21 = arith.constant 0 : index
    %19 = vector.load %arg4[%c0_20, %c0_21] : memref<16x16xf32, #tpu.memory_space<vmem>>, vector<16x16xf32>
    %c0_22 = arith.constant 0 : index
    %c0_23 = arith.constant 0 : index
    %20 = vector.load %arg12[%c0_22, %c0_23] : memref<16x64xf32, #tpu.memory_space<vmem>>, vector<16x64xf32>
    %cst_24 = arith.constant dense<0.000000e+00> : vector<16x64xf32>
    %21 = tpu.matmul %19, %20, %cst_24 {dimension_numbers = #tpu.dot_dimension_numbers<[1], [0], [0], [1], [0, 0, 1, 1], [], []>} : vector<16x16xf32>, vector<16x64xf32>, vector<16x64xf32> -> vector<16x64xf32>
    %22 = arith.addf %18, %21 : vector<16x64xf32>
    %c0_25 = arith.constant 0 : index
    %c0_26 = arith.constant 0 : index
    %23 = vector.load %arg13[%c0_25, %c0_26] : memref<1x64xf32, #tpu.memory_space<vmem>>, vector<1x64xf32>
    %24 = vector.broadcast %23 : vector<1x64xf32> to vector<16x64xf32>
    %25 = arith.addf %22, %24 : vector<16x64xf32>
    %cst_27 = arith.constant 0.000000e+00 : f32
    %26 = vector.broadcast %cst_27 : f32 to vector<16x64xf32>
    %27 = arith.maximumf %25, %26 : vector<16x64xf32>
    %c0_28 = arith.constant 0 : index
    %c0_29 = arith.constant 0 : index
    %28 = vector.load %arg14[%c0_28, %c0_29] : memref<64x32xf32, #tpu.memory_space<vmem>>, vector<64x32xf32>
    %cst_30 = arith.constant dense<0.000000e+00> : vector<16x32xf32>
    %29 = tpu.matmul %27, %28, %cst_30 {dimension_numbers = #tpu.dot_dimension_numbers<[1], [0], [0], [1], [0, 0, 1, 1], [], []>} : vector<16x64xf32>, vector<64x32xf32>, vector<16x32xf32> -> vector<16x32xf32>
    %c0_31 = arith.constant 0 : index
    %c0_32 = arith.constant 0 : index
    %30 = vector.load %arg15[%c0_31, %c0_32] : memref<1x32xf32, #tpu.memory_space<vmem>>, vector<1x32xf32>
    %31 = vector.broadcast %30 : vector<1x32xf32> to vector<16x32xf32>
    %32 = arith.addf %29, %31 : vector<16x32xf32>
    %cst_33 = arith.constant 0.000000e+00 : f32
    %33 = vector.broadcast %cst_33 : f32 to vector<16x32xf32>
    %34 = arith.maximumf %32, %33 : vector<16x32xf32>
    %c0_34 = arith.constant 0 : index
    %c0_35 = arith.constant 0 : index
    %35 = vector.load %arg16[%c0_34, %c0_35] : memref<32x16xf32, #tpu.memory_space<vmem>>, vector<32x16xf32>
    %cst_36 = arith.constant dense<0.000000e+00> : vector<16x16xf32>
    %36 = tpu.matmul %34, %35, %cst_36 {dimension_numbers = #tpu.dot_dimension_numbers<[1], [0], [0], [1], [0, 0, 1, 1], [], []>} : vector<16x32xf32>, vector<32x16xf32>, vector<16x16xf32> -> vector<16x16xf32>
    %c0_37 = arith.constant 0 : index
    %c0_38 = arith.constant 0 : index
    %37 = vector.load %arg17[%c0_37, %c0_38] : memref<1x16xf32, #tpu.memory_space<vmem>>, vector<1x16xf32>
    %38 = vector.broadcast %37 : vector<1x16xf32> to vector<16x16xf32>
    %39 = arith.addf %36, %38 : vector<16x16xf32>
    %cst_39 = arith.constant 0.000000e+00 : f32
    %40 = vector.broadcast %cst_39 : f32 to vector<16x16xf32>
    %41 = arith.maximumf %39, %40 : vector<16x16xf32>
    %c0_40 = arith.constant 0 : index
    %c0_41 = arith.constant 0 : index
    %42 = vector.load %arg5[%c0_40, %c0_41] : memref<16x16xf32, #tpu.memory_space<vmem>>, vector<16x16xf32>
    %c0_42 = arith.constant 0 : index
    %c0_43 = arith.constant 0 : index
    %43 = vector.load %arg18[%c0_42, %c0_43] : memref<16x32xf32, #tpu.memory_space<vmem>>, vector<16x32xf32>
    %cst_44 = arith.constant dense<0.000000e+00> : vector<16x32xf32>
    %44 = tpu.matmul %42, %43, %cst_44 {dimension_numbers = #tpu.dot_dimension_numbers<[1], [0], [0], [1], [0, 0, 1, 1], [], []>} : vector<16x16xf32>, vector<16x32xf32>, vector<16x32xf32> -> vector<16x32xf32>
    %c0_45 = arith.constant 0 : index
    %c0_46 = arith.constant 0 : index
    %45 = vector.load %arg19[%c0_45, %c0_46] : memref<16x32xf32, #tpu.memory_space<vmem>>, vector<16x32xf32>
    %cst_47 = arith.constant dense<0.000000e+00> : vector<16x32xf32>
    %46 = tpu.matmul %12, %45, %cst_47 {dimension_numbers = #tpu.dot_dimension_numbers<[1], [0], [0], [1], [0, 0, 1, 1], [], []>} : vector<16x16xf32>, vector<16x32xf32>, vector<16x32xf32> -> vector<16x32xf32>
    %47 = arith.addf %44, %46 : vector<16x32xf32>
    %c0_48 = arith.constant 0 : index
    %c0_49 = arith.constant 0 : index
    %48 = vector.load %arg20[%c0_48, %c0_49] : memref<1x32xf32, #tpu.memory_space<vmem>>, vector<1x32xf32>
    %49 = vector.broadcast %48 : vector<1x32xf32> to vector<16x32xf32>
    %50 = arith.addf %47, %49 : vector<16x32xf32>
    %cst_50 = arith.constant 0.000000e+00 : f32
    %51 = vector.broadcast %cst_50 : f32 to vector<16x32xf32>
    %52 = arith.maximumf %50, %51 : vector<16x32xf32>
    %c0_51 = arith.constant 0 : index
    %c0_52 = arith.constant 0 : index
    %53 = vector.load %arg21[%c0_51, %c0_52] : memref<32x16xf32, #tpu.memory_space<vmem>>, vector<32x16xf32>
    %cst_53 = arith.constant dense<0.000000e+00> : vector<16x16xf32>
    %54 = tpu.matmul %52, %53, %cst_53 {dimension_numbers = #tpu.dot_dimension_numbers<[1], [0], [0], [1], [0, 0, 1, 1], [], []>} : vector<16x32xf32>, vector<32x16xf32>, vector<16x16xf32> -> vector<16x16xf32>
    %c0_54 = arith.constant 0 : index
    %c0_55 = arith.constant 0 : index
    %55 = vector.load %arg22[%c0_54, %c0_55] : memref<1x16xf32, #tpu.memory_space<vmem>>, vector<1x16xf32>
    %56 = vector.broadcast %55 : vector<1x16xf32> to vector<16x16xf32>
    %57 = arith.addf %54, %56 : vector<16x16xf32>
    %cst_56 = arith.constant 0.000000e+00 : f32
    %58 = vector.broadcast %cst_56 : f32 to vector<16x16xf32>
    %59 = arith.maximumf %57, %58 : vector<16x16xf32>
    %c0_57 = arith.constant 0 : index
    %c0_58 = arith.constant 0 : index
    %60 = vector.load %arg23[%c0_57, %c0_58] : memref<1x16xf32, #tpu.memory_space<vmem>>, vector<1x16xf32>
    %61 = vector.broadcast %60 : vector<1x16xf32> to vector<16x16xf32>
    %62 = arith.mulf %41, %61 : vector<16x16xf32>
    %cst_59 = arith.constant dense<0.000000e+00> : vector<16xf32>
    %63 = vector.multi_reduction <add>, %62, %cst_59 [1] : vector<16x16xf32> to vector<16xf32>
    %64 = vector.shape_cast %63 : vector<16xf32> to vector<16x1xf32>
    %c0_60 = arith.constant 0 : index
    %c0_61 = arith.constant 0 : index
    %65 = vector.load %arg24[%c0_60, %c0_61] : memref<1x8xf32, #tpu.memory_space<vmem>>, vector<1x8xf32>
    %66 = vector.broadcast %65 : vector<1x8xf32> to vector<16x8xf32>
    %67 = arith.mulf %15, %66 : vector<16x8xf32>
    %cst_62 = arith.constant dense<0.000000e+00> : vector<16xf32>
    %68 = vector.multi_reduction <add>, %67, %cst_62 [1] : vector<16x8xf32> to vector<16xf32>
    %69 = vector.shape_cast %68 : vector<16xf32> to vector<16x1xf32>
    %70 = arith.addf %64, %69 : vector<16x1xf32>
    %c0_63 = arith.constant 0 : index
    %c0_64 = arith.constant 0 : index
    %71 = vector.load %arg25[%c0_63, %c0_64] : memref<1x16xf32, #tpu.memory_space<vmem>>, vector<1x16xf32>
    %72 = vector.broadcast %71 : vector<1x16xf32> to vector<16x16xf32>
    %73 = arith.mulf %59, %72 : vector<16x16xf32>
    %cst_65 = arith.constant dense<0.000000e+00> : vector<16xf32>
    %74 = vector.multi_reduction <add>, %73, %cst_65 [1] : vector<16x16xf32> to vector<16xf32>
    %75 = vector.shape_cast %74 : vector<16xf32> to vector<16x1xf32>
    %76 = arith.addf %70, %75 : vector<16x1xf32>
    %c0_66 = arith.constant 0 : index
    %c0_67 = arith.constant 0 : index
    %77 = vector.load %arg26[%c0_66, %c0_67] : memref<1x1xf32, #tpu.memory_space<vmem>>, vector<1x1xf32>
    %78 = vector.broadcast %77 : vector<1x1xf32> to vector<16x1xf32>
    %79 = arith.addf %76, %78 : vector<16x1xf32>
    %cst_68 = arith.constant 0.000000e+00 : f32
    %80 = vector.broadcast %cst_68 : f32 to vector<16x1xf32>
    %81 = arith.subf %80, %79 : vector<16x1xf32>
    %82 = math.exp %81 : vector<16x1xf32>
    %cst_69 = arith.constant 1.000000e+00 : f32
    %83 = vector.broadcast %cst_69 : f32 to vector<16x1xf32>
    %84 = arith.addf %83, %82 : vector<16x1xf32>
    %cst_70 = arith.constant 1.000000e+00 : f32
    %85 = vector.broadcast %cst_70 : f32 to vector<16x1xf32>
    %86 = arith.divf %85, %84 : vector<16x1xf32>
    %c0_71 = arith.constant 0 : index
    %c0_72 = arith.constant 0 : index
    %87 = vector.load %arg27[%c0_71, %c0_72] : memref<16x1xf32, #tpu.memory_space<vmem>>, vector<16x1xf32>
    tpu.vector_store %arg27[%c0_71, %c0_72], %86 {strides = array<i32>} : memref<16x1xf32, #tpu.memory_space<vmem>>, vector<16x1xf32>,
    return
  }
  func.func @transform_0(%arg0: i32) -> (i32, i32) {
    %c0_i32 = arith.constant 0 : i32
    %c0_i32_0 = arith.constant 0 : i32
    return %arg0, %c0_i32 : i32, i32
  }
  func.func @transform_1(%arg0: i32) -> (i32, i32) {
    %c0_i32 = arith.constant 0 : i32
    %c0_i32_0 = arith.constant 0 : i32
    return %arg0, %c0_i32 : i32, i32
  }
  func.func @transform_2(%arg0: i32) -> (i32, i32) {
    %c0_i32 = arith.constant 0 : i32
    %c0_i32_0 = arith.constant 0 : i32
    return %arg0, %c0_i32 : i32, i32
  }
  func.func @transform_3(%arg0: i32) -> (i32, i32) {
    %c0_i32 = arith.constant 0 : i32
    %c0_i32_0 = arith.constant 0 : i32
    return %arg0, %c0_i32 : i32, i32
  }
  func.func @transform_4(%arg0: i32) -> (i32, i32) {
    %c0_i32 = arith.constant 0 : i32
    %c0_i32_0 = arith.constant 0 : i32
    return %arg0, %c0_i32 : i32, i32
  }
  func.func @transform_5(%arg0: i32) -> (i32, i32) {
    %c0_i32 = arith.constant 0 : i32
    %c0_i32_0 = arith.constant 0 : i32
    return %arg0, %c0_i32 : i32, i32
  }
  func.func @transform_6(%arg0: i32) -> (i32, i32) {
    %c0_i32 = arith.constant 0 : i32
    %c0_i32_0 = arith.constant 0 : i32
    %c0_i32_1 = arith.constant 0 : i32
    return %c0_i32, %c0_i32_0 : i32, i32
  }
  func.func @transform_7(%arg0: i32) -> (i32, i32) {
    %c0_i32 = arith.constant 0 : i32
    %c0_i32_0 = arith.constant 0 : i32
    %c0_i32_1 = arith.constant 0 : i32
    return %c0_i32, %c0_i32_0 : i32, i32
  }
  func.func @transform_8(%arg0: i32) -> (i32, i32) {
    %c0_i32 = arith.constant 0 : i32
    %c0_i32_0 = arith.constant 0 : i32
    %c0_i32_1 = arith.constant 0 : i32
    return %c0_i32, %c0_i32_0 : i32, i32
  }
  func.func @transform_9(%arg0: i32) -> (i32, i32) {
    %c0_i32 = arith.constant 0 : i32
    %c0_i32_0 = arith.constant 0 : i32
    %c0_i32_1 = arith.constant 0 : i32
    return %c0_i32, %c0_i32_0 : i32, i32
  }
  func.func @transform_10(%arg0: i32) -> (i32, i32) {
    %c0_i32 = arith.constant 0 : i32
    %c0_i32_0 = arith.constant 0 : i32
    %c0_i32_1 = arith.constant 0 : i32
    return %c0_i32, %c0_i32_0 : i32, i32
  }
  func.func @transform_11(%arg0: i32) -> (i32, i32) {
    %c0_i32 = arith.constant 0 : i32
    %c0_i32_0 = arith.constant 0 : i32
    %c0_i32_1 = arith.constant 0 : i32
    return %c0_i32, %c0_i32_0 : i32, i32
  }
  func.func @transform_12(%arg0: i32) -> (i32, i32) {
    %c0_i32 = arith.constant 0 : i32
    %c0_i32_0 = arith.constant 0 : i32
    %c0_i32_1 = arith.constant 0 : i32
    return %c0_i32, %c0_i32_0 : i32, i32
  }
  func.func @transform_13(%arg0: i32) -> (i32, i32) {
    %c0_i32 = arith.constant 0 : i32
    %c0_i32_0 = arith.constant 0 : i32
    %c0_i32_1 = arith.constant 0 : i32
    return %c0_i32, %c0_i32_0 : i32, i32
  }
  func.func @transform_14(%arg0: i32) -> (i32, i32) {
    %c0_i32 = arith.constant 0 : i32
    %c0_i32_0 = arith.constant 0 : i32
    %c0_i32_1 = arith.constant 0 : i32
    return %c0_i32, %c0_i32_0 : i32, i32
  }
  func.func @transform_15(%arg0: i32) -> (i32, i32) {
    %c0_i32 = arith.constant 0 : i32
    %c0_i32_0 = arith.constant 0 : i32
    %c0_i32_1 = arith.constant 0 : i32
    return %c0_i32, %c0_i32_0 : i32, i32
  }
  func.func @transform_16(%arg0: i32) -> (i32, i32) {
    %c0_i32 = arith.constant 0 : i32
    %c0_i32_0 = arith.constant 0 : i32
    %c0_i32_1 = arith.constant 0 : i32
    return %c0_i32, %c0_i32_0 : i32, i32
  }
  func.func @transform_17(%arg0: i32) -> (i32, i32) {
    %c0_i32 = arith.constant 0 : i32
    %c0_i32_0 = arith.constant 0 : i32
    %c0_i32_1 = arith.constant 0 : i32
    return %c0_i32, %c0_i32_0 : i32, i32
  }
  func.func @transform_18(%arg0: i32) -> (i32, i32) {
    %c0_i32 = arith.constant 0 : i32
    %c0_i32_0 = arith.constant 0 : i32
    %c0_i32_1 = arith.constant 0 : i32
    return %c0_i32, %c0_i32_0 : i32, i32
  }
  func.func @transform_19(%arg0: i32) -> (i32, i32) {
    %c0_i32 = arith.constant 0 : i32
    %c0_i32_0 = arith.constant 0 : i32
    %c0_i32_1 = arith.constant 0 : i32
    return %c0_i32, %c0_i32_0 : i32, i32
  }
  func.func @transform_20(%arg0: i32) -> (i32, i32) {
    %c0_i32 = arith.constant 0 : i32
    %c0_i32_0 = arith.constant 0 : i32
    %c0_i32_1 = arith.constant 0 : i32
    return %c0_i32, %c0_i32_0 : i32, i32
  }
  func.func @transform_21(%arg0: i32) -> (i32, i32) {
    %c0_i32 = arith.constant 0 : i32
    %c0_i32_0 = arith.constant 0 : i32
    %c0_i32_1 = arith.constant 0 : i32
    return %c0_i32, %c0_i32_0 : i32, i32
  }
  func.func @transform_22(%arg0: i32) -> (i32, i32) {
    %c0_i32 = arith.constant 0 : i32
    %c0_i32_0 = arith.constant 0 : i32
    %c0_i32_1 = arith.constant 0 : i32
    return %c0_i32, %c0_i32_0 : i32, i32
  }
  func.func @transform_23(%arg0: i32) -> (i32, i32) {
    %c0_i32 = arith.constant 0 : i32
    %c0_i32_0 = arith.constant 0 : i32
    %c0_i32_1 = arith.constant 0 : i32
    return %c0_i32, %c0_i32_0 : i32, i32
  }
  func.func @transform_24(%arg0: i32) -> (i32, i32) {
    %c0_i32 = arith.constant 0 : i32
    %c0_i32_0 = arith.constant 0 : i32
    %c0_i32_1 = arith.constant 0 : i32
    return %c0_i32, %c0_i32_0 : i32, i32
  }
  func.func @transform_25(%arg0: i32) -> (i32, i32) {
    %c0_i32 = arith.constant 0 : i32
    %c0_i32_0 = arith.constant 0 : i32
    %c0_i32_1 = arith.constant 0 : i32
    return %c0_i32, %c0_i32_0 : i32, i32
  }
  func.func @transform_26(%arg0: i32) -> (i32, i32) {
    %c0_i32 = arith.constant 0 : i32
    %c0_i32_0 = arith.constant 0 : i32
    return %arg0, %c0_i32 : i32, i32
  }
}

</mosaic_0001>

<llo_original>
// kernel: tpu_custom_call.1
$region0: #{tpu_custom_call.1}
  #allocation0 [shape = 'u32[]', space=smem, size = 0x4, offset = 0x4, fixed_abs, tag = 'smem constant byte address 0x4 - core index']
  #allocation1 [shape = 'u32[144,128]{1,0:T(1,128)}', space=vmem, size = 0x12000, scoped, tag = 'internal scratch']
  #allocation2 [shape = 'f32[1,1]{1,0:T(1,128)S(1)}', space=vmem, size = 0x200, scoped, tag = 'scoped memory for tpu_custom_call.1']
  %s0 = inlined_call_operand.vmem [shape: f32[16,8], index: 0, kind: input, shape index: {}]
  %s1 = inlined_call_operand.vmem [shape: f32[16,8], index: 1, kind: input, shape index: {}]
  %s2 = inlined_call_operand.vmem [shape: f32[16,16], index: 2, kind: input, shape index: {}]
  %s3 = inlined_call_operand.vmem [shape: f32[16,16], index: 3, kind: input, shape index: {}]
  %s4 = inlined_call_operand.vmem [shape: f32[16,16], index: 4, kind: input, shape index: {}]
  %s5 = inlined_call_operand.vmem [shape: f32[16,2048], index: 5, kind: input, shape index: {}]
  %s6 = inlined_call_operand.hbm [shape: f32[2048,128], index: 6, kind: input, shape index: {}]
  %s7 = inlined_call_operand.vmem [shape: f32[1,128], index: 7, kind: input, shape index: {}]
  %s8 = inlined_call_operand.vmem [shape: f32[128,16], index: 8, kind: input, shape index: {}]
  %s9 = inlined_call_operand.hbm [shape: f32[1,16], index: 9, kind: input, shape index: {}]
  %s10 = inlined_call_operand.vmem [shape: f32[16,64], index: 10, kind: input, shape index: {}]
  %s11 = inlined_call_operand.vmem [shape: f32[16,64], index: 11, kind: input, shape index: {}]
  %s12 = inlined_call_operand.hbm [shape: f32[1,64], index: 12, kind: input, shape index: {}]
  %s13 = inlined_call_operand.vmem [shape: f32[64,32], index: 13, kind: input, shape index: {}]
  %s14 = inlined_call_operand.vmem [shape: f32[1,32], index: 14, kind: input, shape index: {}]
  %s15 = inlined_call_operand.vmem [shape: f32[32,16], index: 15, kind: input, shape index: {}]
  %s16 = inlined_call_operand.vmem [shape: f32[1,16], index: 16, kind: input, shape index: {}]
  %s17 = inlined_call_operand.vmem [shape: f32[16,32], index: 17, kind: input, shape index: {}]
  %s18 = inlined_call_operand.vmem [shape: f32[16,32], index: 18, kind: input, shape index: {}]
  %s19 = inlined_call_operand.vmem [shape: f32[1,32], index: 19, kind: input, shape index: {}]
  %s20 = inlined_call_operand.vmem [shape: f32[32,16], index: 20, kind: input, shape index: {}]
  %s21 = inlined_call_operand.vmem [shape: f32[1,16], index: 21, kind: input, shape index: {}]
  %s22 = inlined_call_operand.vmem [shape: f32[1,16], index: 22, kind: input, shape index: {}]
  %s23 = inlined_call_operand.vmem [shape: f32[1,8], index: 23, kind: input, shape index: {}]
  %s24 = inlined_call_operand.vmem [shape: f32[1,16], index: 24, kind: input, shape index: {}]
  %s25 = inlined_call_operand.<no memory space> [shape: f32[1,1], index: 25, kind: input, shape index: {}]
  %s26 = inlined_call_operand.vmem [shape: f32[16,1], index: 26, kind: output, shape index: {}]
  %s27 = sld [smem:[#allocation0]]
  $region126: #{tpu_custom_call.1} parent=0
    _
  %s29 = ssub.s32 1, %s27
  %s30 = scalar_select 0, %s29, %s27
  %v31 = vstv %s25
  %32 = vst [vmem:[#allocation2] sm:$0x1] %v31
  $region1: #{tpu_custom_call.1} parent=0
    #allocation3 [shape = 'u8[1048576]{0}', space=vmem, size = 0x100000, scoped, tag = 'input window, operand 6, single buffered']
    #allocation4 [shape = 's32[1]{0}', space=sflag, size = 0x4, scoped, tag = 'scoped memory for tpu_custom_call.1']
    #allocation5 [shape = 'u8[512]{0}', space=vmem, size = 0x400, scoped, tag = 'input window, operand 9, single buffered']
    #allocation6 [shape = 's32[1]{0}', space=sflag, size = 0x4, scoped, tag = 'scoped memory for tpu_custom_call.1']
    #allocation7 [shape = 'u8[512]{0}', space=vmem, size = 0x400, scoped, tag = 'input window, operand 12, single buffered']
    %33 = vsyncpa [#allocation4], 0
    %34 = vsyncpa [#allocation6], 0
    // Predicated region
    $region2: #{tpu_custom_call.1} parent=1 // pred_check
      _
    $region3: #{tpu_custom_call.1} parent=1 // pred_check_branch
      %36 = sbr.rel (0) target = $region5
    $region4: #{tpu_custom_call.1} parent=1 // pred_region
      _
    $region5: #{tpu_custom_call.1} parent=1 // pred_fallthru
      _
    // Predicated region
    $region6: #{tpu_custom_call.1} parent=1 // pred_check
      _
    $region7: #{tpu_custom_call.1} parent=1 // pred_check_branch
      %38 = sbr.rel (0) target = $region9
    $region8: #{tpu_custom_call.1} parent=1 // pred_region
      _
    $region9: #{tpu_custom_call.1} parent=1 // pred_fallthru
      _
    // Predicated region
    $region10: #{tpu_custom_call.1} parent=1 // pred_check
      _
    $region11: #{tpu_custom_call.1} parent=1 // pred_check_branch
      %40 = sbr.rel (0) target = $region13
    $region12: #{tpu_custom_call.1} parent=1 // pred_region
      _
    $region13: #{tpu_custom_call.1} parent=1 // pred_fallthru
      _
    // Predicated region
    $region14: #{tpu_custom_call.1} parent=1 // pred_check
      _
    $region15: #{tpu_custom_call.1} parent=1 // pred_check_branch
      %42 = sbr.rel (0) target = $region17
    $region16: #{tpu_custom_call.1} parent=1 // pred_region
      _
    $region17: #{tpu_custom_call.1} parent=1 // pred_fallthru
      _
    // Predicated region
    $region18: #{tpu_custom_call.1} parent=1 // pred_check
      _
    $region19: #{tpu_custom_call.1} parent=1 // pred_check_branch
      %44 = sbr.rel (0) target = $region21
    $region20: #{tpu_custom_call.1} parent=1 // pred_region
      _
    $region21: #{tpu_custom_call.1} parent=1 // pred_fallthru
      _
    // Predicated region
    $region22: #{tpu_custom_call.1} parent=1 // pred_check
      _
    $region23: #{tpu_custom_call.1} parent=1 // pred_check_branch
      %46 = sbr.rel (0) target = $region25
    $region24: #{tpu_custom_call.1} parent=1 // pred_region
      _
    $region25: #{tpu_custom_call.1} parent=1 // pred_fallthru
      _
    // Predicated region
    $region26: #{tpu_custom_call.1} parent=1 // pred_check
      _
    $region27: #{tpu_custom_call.1} parent=1 // pred_check_branch
      %48 = sbr.rel (0) target = $region29
    $region28: #{tpu_custom_call.1} parent=1 // pred_region
      %s50 = ssub.s32 32768, 32768
      %51 = vsyncadd [#allocation4], %s50
      %s52 = sshll.u32 [#allocation3], 4
      %s53 = int_to_ptr.vmem [resolvable:$true] %s52
      %58 = dma.hbm_to_vmem [thread:$0]  %s6, 32768, %s53, [#allocation4], 128, 128, 8
    $region29: #{tpu_custom_call.1} parent=1 // pred_fallthru
      _
    // Predicated region
    $region30: #{tpu_custom_call.1} parent=1 // pred_check
      _
    $region31: #{tpu_custom_call.1} parent=1 // pred_check_branch
      %60 = sbr.rel (0) target = $region33
    $region32: #{tpu_custom_call.1} parent=1 // pred_region
      _
    $region33: #{tpu_custom_call.1} parent=1 // pred_fallthru
      _
    // Predicated region
    $region34: #{tpu_custom_call.1} parent=1 // pred_check
      _
    $region35: #{tpu_custom_call.1} parent=1 // pred_check_branch
      %62 = sbr.rel (0) target = $region37
    $region36: #{tpu_custom_call.1} parent=1 // pred_region
      _
    $region37: #{tpu_custom_call.1} parent=1 // pred_fallthru
      _
    // Predicated region
    $region38: #{tpu_custom_call.1} parent=1 // pred_check
      _
    $region39: #{tpu_custom_call.1} parent=1 // pred_check_branch
      %64 = sbr.rel (0) target = $region41
    $region40: #{tpu_custom_call.1} parent=1 // pred_region
      %s66 = ssub.s32 16, 16
      %67 = vsyncadd [#allocation6], %s66
      %s69 = sshll.u32 [#allocation5], 4
      %s70 = int_to_ptr.vmem [resolvable:$true] %s69
      %72 = dma.hbm_to_vmem [thread:$0]  %s9, 16, %s70, [#allocation6]
    $region41: #{tpu_custom_call.1} parent=1 // pred_fallthru
      _
    // Predicated region
    $region42: #{tpu_custom_call.1} parent=1 // pred_check
      _
    $region43: #{tpu_custom_call.1} parent=1 // pred_check_branch
      %74 = sbr.rel (0) target = $region45
    $region44: #{tpu_custom_call.1} parent=1 // pred_region
      _
    $region45: #{tpu_custom_call.1} parent=1 // pred_fallthru
      _
    // Predicated region
    $region46: #{tpu_custom_call.1} parent=1 // pred_check
      _
    $region47: #{tpu_custom_call.1} parent=1 // pred_check_branch
      %76 = sbr.rel (0) target = $region49
    $region48: #{tpu_custom_call.1} parent=1 // pred_region
      _
    $region49: #{tpu_custom_call.1} parent=1 // pred_fallthru
      _
    // Predicated region
    $region50: #{tpu_custom_call.1} parent=1 // pred_check
      _
    $region51: #{tpu_custom_call.1} parent=1 // pred_check_branch
      %78 = sbr.rel (0) target = $region53
    $region52: #{tpu_custom_call.1} parent=1 // pred_region
      %s80 = ssub.s32 16, 16
      %81 = vsyncadd [#allocation6], %s80
      %s83 = sshll.u32 [#allocation7], 4
      %s84 = int_to_ptr.vmem [resolvable:$true] %s83
      %86 = dma.hbm_to_vmem [thread:$0]  %s12, 16, %s84, [#allocation6]
    $region53: #{tpu_custom_call.1} parent=1 // pred_fallthru
      _
    // Predicated region
    $region54: #{tpu_custom_call.1} parent=1 // pred_check
      _
    $region55: #{tpu_custom_call.1} parent=1 // pred_check_branch
      %88 = sbr.rel (0) target = $region57
    $region56: #{tpu_custom_call.1} parent=1 // pred_region
      _
    $region57: #{tpu_custom_call.1} parent=1 // pred_fallthru
      _
    // Predicated region
    $region58: #{tpu_custom_call.1} parent=1 // pred_check
      _
    $region59: #{tpu_custom_call.1} parent=1 // pred_check_branch
      %90 = sbr.rel (0) target = $region61
    $region60: #{tpu_custom_call.1} parent=1 // pred_region
      _
    $region61: #{tpu_custom_call.1} parent=1 // pred_fallthru
      _
    // Predicated region
    $region62: #{tpu_custom_call.1} parent=1 // pred_check
      _
    $region63: #{tpu_custom_call.1} parent=1 // pred_check_branch
      %92 = sbr.rel (0) target = $region65
    $region64: #{tpu_custom_call.1} parent=1 // pred_region
      _
    $region65: #{tpu_custom_call.1} parent=1 // pred_fallthru
      _
    // Predicated region
    $region66: #{tpu_custom_call.1} parent=1 // pred_check
      _
    $region67: #{tpu_custom_call.1} parent=1 // pred_check_branch
      %94 = sbr.rel (0) target = $region69
    $region68: #{tpu_custom_call.1} parent=1 // pred_region
      _
    $region69: #{tpu_custom_call.1} parent=1 // pred_fallthru
      _
    // Predicated region
    $region70: #{tpu_custom_call.1} parent=1 // pred_check
      _
    $region71: #{tpu_custom_call.1} parent=1 // pred_check_branch
      %96 = sbr.rel (0) target = $region73
    $region72: #{tpu_custom_call.1} parent=1 // pred_region
      _
    $region73: #{tpu_custom_call.1} parent=1 // pred_fallthru
      _
    // Predicated region
    $region74: #{tpu_custom_call.1} parent=1 // pred_check
      _
    $region75: #{tpu_custom_call.1} parent=1 // pred_check_branch
      %98 = sbr.rel (0) target = $region77
    $region76: #{tpu_custom_call.1} parent=1 // pred_region
      _
    $region77: #{tpu_custom_call.1} parent=1 // pred_fallthru
      _
    // Predicated region
    $region78: #{tpu_custom_call.1} parent=1 // pred_check
      _
    $region79: #{tpu_custom_call.1} parent=1 // pred_check_branch
      %100 = sbr.rel (0) target = $region81
    $region80: #{tpu_custom_call.1} parent=1 // pred_region
      _
    $region81: #{tpu_custom_call.1} parent=1 // pred_fallthru
      _
    // Predicated region
    $region82: #{tpu_custom_call.1} parent=1 // pred_check
      _
    $region83: #{tpu_custom_call.1} parent=1 // pred_check_branch
      %102 = sbr.rel (0) target = $region85
    $region84: #{tpu_custom_call.1} parent=1 // pred_region
      _
    $region85: #{tpu_custom_call.1} parent=1 // pred_fallthru
      _
    // Predicated region
    $region86: #{tpu_custom_call.1} parent=1 // pred_check
      _
    $region87: #{tpu_custom_call.1} parent=1 // pred_check_branch
      %104 = sbr.rel (0) target = $region89
    $region88: #{tpu_custom_call.1} parent=1 // pred_region
      _
    $region89: #{tpu_custom_call.1} parent=1 // pred_fallthru
      _
    // Predicated region
    $region90: #{tpu_custom_call.1} parent=1 // pred_check
      _
    $region91: #{tpu_custom_call.1} parent=1 // pred_check_branch
      %106 = sbr.rel (0) target = $region93
    $region92: #{tpu_custom_call.1} parent=1 // pred_region
      _
    $region93: #{tpu_custom_call.1} parent=1 // pred_fallthru
      _
    // Predicated region
    $region94: #{tpu_custom_call.1} parent=1 // pred_check
      _
    $region95: #{tpu_custom_call.1} parent=1 // pred_check_branch
      %108 = sbr.rel (0) target = $region97
    $region96: #{tpu_custom_call.1} parent=1 // pred_region
      _
    $region97: #{tpu_custom_call.1} parent=1 // pred_fallthru
      _
    // Predicated region
    $region98: #{tpu_custom_call.1} parent=1 // pred_check
      _
    $region99: #{tpu_custom_call.1} parent=1 // pred_check_branch
      %110 = sbr.rel (0) target = $region101
    $region100: #{tpu_custom_call.1} parent=1 // pred_region
      _
    $region101: #{tpu_custom_call.1} parent=1 // pred_fallthru
      _
    // Predicated region
    $region102: #{tpu_custom_call.1} parent=1 // pred_check
      _
    $region103: #{tpu_custom_call.1} parent=1 // pred_check_branch
      %112 = sbr.rel (0) target = $region105
    $region104: #{tpu_custom_call.1} parent=1 // pred_region
      _
    $region105: #{tpu_custom_call.1} parent=1 // pred_fallthru
      _
    // Predicated region
    $region106: #{tpu_custom_call.1} parent=1 // pred_check
      _
    $region107: #{tpu_custom_call.1} parent=1 // pred_check_branch
      %114 = sbr.rel (0) target = $region109
    $region108: #{tpu_custom_call.1} parent=1 // pred_region
      %115 = dma.done [#allocation4], 32768
    $region109: #{tpu_custom_call.1} parent=1 // pred_fallthru
      _
    // Predicated region
    $region110: #{tpu_custom_call.1} parent=1 // pred_check
      _
    $region111: #{tpu_custom_call.1} parent=1 // pred_check_branch
      %117 = sbr.rel (0) target = $region113
    $region112: #{tpu_custom_call.1} parent=1 // pred_region
      %118 = dma.done [#allocation6], 16
    $region113: #{tpu_custom_call.1} parent=1 // pred_fallthru
      _
    // Predicated region
    $region114: #{tpu_custom_call.1} parent=1 // pred_check
      _
    $region115: #{tpu_custom_call.1} parent=1 // pred_check_branch
      %120 = sbr.rel (0) target = $region117
    $region116: #{tpu_custom_call.1} parent=1 // pred_region
      %121 = dma.done [#allocation6], 16
    $region117: #{tpu_custom_call.1} parent=1 // pred_fallthru
      _
    %v122 = vld [vmem:[#allocation3] sm:$0xff]
    %v123 = vld [vmem:[#allocation3 + $0x8] sm:$0xff]
    %v124 = vld [vmem:[#allocation3 + $0x10] sm:$0xff]
    %v125 = vld [vmem:[#allocation3 + $0x18] sm:$0xff]
    %v126 = vld [vmem:[#allocation3 + $0x20] sm:$0xff]
    %v127 = vld [vmem:[#allocation3 + $0x28] sm:$0xff]
    %v128 = vld [vmem:[#allocation3 + $0x30] sm:$0xff]
    %v129 = vld [vmem:[#allocation3 + $0x38] sm:$0xff]
    %v130 = vld [vmem:[#allocation3 + $0x40] sm:$0xff]
    %v131 = vld [vmem:[#allocation3 + $0x48] sm:$0xff]
    %v132 = vld [vmem:[#allocation3 + $0x50] sm:$0xff]
    %v133 = vld [vmem:[#allocation3 + $0x58] sm:$0xff]
    %v134 = vld [vmem:[#allocation3 + $0x60] sm:$0xff]
    %v135 = vld [vmem:[#allocation3 + $0x68] sm:$0xff]
    %v136 = vld [vmem:[#allocation3 + $0x70] sm:$0xff]
    %v137 = vld [vmem:[#allocation3 + $0x78] sm:$0xff]
    %v138 = vld [vmem:[#allocation3 + $0x80] sm:$0xff]
    %v139 = vld [vmem:[#allocation3 + $0x88] sm:$0xff]
    %v140 = vld [vmem:[#allocation3 + $0x90] sm:$0xff]
    %v141 = vld [vmem:[#allocation3 + $0x98] sm:$0xff]
    %v142 = vld [vmem:[#allocation3 + $0xa0] sm:$0xff]
    %v143 = vld [vmem:[#allocation3 + $0xa8] sm:$0xff]
    %v144 = vld [vmem:[#allocation3 + $0xb0] sm:$0xff]
    %v145 = vld [vmem:[#allocation3 + $0xb8] sm:$0xff]
    %v146 = vld [vmem:[#allocation3 + $0xc0] sm:$0xff]
    %v147 = vld [vmem:[#allocation3 + $0xc8] sm:$0xff]
    %v148 = vld [vmem:[#allocation3 + $0xd0] sm:$0xff]
    %v149 = vld [vmem:[#allocation3 + $0xd8] sm:$0xff]
    %v150 = vld [vmem:[#allocation3 + $0xe0] sm:$0xff]
    %v151 = vld [vmem:[#allocation3 + $0xe8] sm:$0xff]
    %v152 = vld [vmem:[#allocation3 + $0xf0] sm:$0xff]
    %v153 = vld [vmem:[#allocation3 + $0xf8] sm:$0xff]
    %v154 = vld [vmem:[#allocation3 + $0x100] sm:$0xff]
    %v155 = vld [vmem:[#allocation3 + $0x108] sm:$0xff]
    %v156 = vld [vmem:[#allocation3 + $0x110] sm:$0xff]
    %v157 = vld [vmem:[#allocation3 + $0x118] sm:$0xff]
    %v158 = vld [vmem:[#allocation3 + $0x120] sm:$0xff]
    %v159 = vld [vmem:[#allocation3 + $0x128] sm:$0xff]
    %v160 = vld [vmem:[#allocation3 + $0x130] sm:$0xff]
    %v161 = vld [vmem:[#allocation3 + $0x138] sm:$0xff]
    %v162 = vld [vmem:[#allocation3 + $0x140] sm:$0xff]
    %v163 = vld [vmem:[#allocation3 + $0x148] sm:$0xff]
    %v164 = vld [vmem:[#allocation3 + $0x150] sm:$0xff]
    %v165 = vld [vmem:[#allocation3 + $0x158] sm:$0xff]
    %v166 = vld [vmem:[#allocation3 + $0x160] sm:$0xff]
    %v167 = vld [vmem:[#allocation3 + $0x168] sm:$0xff]
    %v168 = vld [vmem:[#allocation3 + $0x170] sm:$0xff]
    %v169 = vld [vmem:[#allocation3 + $0x178] sm:$0xff]
    %v170 = vld [vmem:[#allocation3 + $0x180] sm:$0xff]
    %v171 = vld [vmem:[#allocation3 + $0x188] sm:$0xff]
    %v172 = vld [vmem:[#allocation3 + $0x190] sm:$0xff]
    %v173 = vld [vmem:[#allocation3 + $0x198] sm:$0xff]
    %v174 = vld [vmem:[#allocation3 + $0x1a0] sm:$0xff]
    %v175 = vld [vmem:[#allocation3 + $0x1a8] sm:$0xff]
    %v176 = vld [vmem:[#allocation3 + $0x1b0] sm:$0xff]
    %v177 = vld [vmem:[#allocation3 + $0x1b8] sm:$0xff]
    %v178 = vld [vmem:[#allocation3 + $0x1c0] sm:$0xff]
    %v179 = vld [vmem:[#allocation3 + $0x1c8] sm:$0xff]
    %v180 = vld [vmem:[#allocation3 + $0x1d0] sm:$0xff]
    %v181 = vld [vmem:[#allocation3 + $0x1d8] sm:$0xff]
    %v182 = vld [vmem:[#allocation3 + $0x1e0] sm:$0xff]
    %v183 = vld [vmem:[#allocation3 + $0x1e8] sm:$0xff]
    %v184 = vld [vmem:[#allocation3 + $0x1f0] sm:$0xff]
    %v185 = vld [vmem:[#allocation3 + $0x1f8] sm:$0xff]
    %v186 = vld [vmem:[#allocation3 + $0x200] sm:$0xff]
    %v187 = vld [vmem:[#allocation3 + $0x208] sm:$0xff]
    %v188 = vld [vmem:[#allocation3 + $0x210] sm:$0xff]
    %v189 = vld [vmem:[#allocation3 + $0x218] sm:$0xff]
    %v190 = vld [vmem:[#allocation3 + $0x220] sm:$0xff]
    %v191 = vld [vmem:[#allocation3 + $0x228] sm:$0xff]
    %v192 = vld [vmem:[#allocation3 + $0x230] sm:$0xff]
    %v193 = vld [vmem:[#allocation3 + $0x238] sm:$0xff]
    %v194 = vld [vmem:[#allocation3 + $0x240] sm:$0xff]
    %v195 = vld [vmem:[#allocation3 + $0x248] sm:$0xff]
    %v196 = vld [vmem:[#allocation3 + $0x250] sm:$0xff]
    %v197 = vld [vmem:[#allocation3 + $0x258] sm:$0xff]
    %v198 = vld [vmem:[#allocation3 + $0x260] sm:$0xff]
    %v199 = vld [vmem:[#allocation3 + $0x268] sm:$0xff]
    %v200 = vld [vmem:[#allocation3 + $0x270] sm:$0xff]
    %v201 = vld [vmem:[#allocation3 + $0x278] sm:$0xff]
    %v202 = vld [vmem:[#allocation3 + $0x280] sm:$0xff]
    %v203 = vld [vmem:[#allocation3 + $0x288] sm:$0xff]
    %v204 = vld [vmem:[#allocation3 + $0x290] sm:$0xff]
    %v205 = vld [vmem:[#allocation3 + $0x298] sm:$0xff]
    %v206 = vld [vmem:[#allocation3 + $0x2a0] sm:$0xff]
    %v207 = vld [vmem:[#allocation3 + $0x2a8] sm:$0xff]
    %v208 = vld [vmem:[#allocation3 + $0x2b0] sm:$0xff]
    %v209 = vld [vmem:[#allocation3 + $0x2b8] sm:$0xff]
    %v210 = vld [vmem:[#allocation3 + $0x2c0] sm:$0xff]
    %v211 = vld [vmem:[#allocation3 + $0x2c8] sm:$0xff]
    %v212 = vld [vmem:[#allocation3 + $0x2d0] sm:$0xff]
    %v213 = vld [vmem:[#allocation3 + $0x2d8] sm:$0xff]
    %v214 = vld [vmem:[#allocation3 + $0x2e0] sm:$0xff]
    %v215 = vld [vmem:[#allocation3 + $0x2e8] sm:$0xff]
    %v216 = vld [vmem:[#allocation3 + $0x2f0] sm:$0xff]
    %v217 = vld [vmem:[#allocation3 + $0x2f8] sm:$0xff]
    %v218 = vld [vmem:[#allocation3 + $0x300] sm:$0xff]
    %v219 = vld [vmem:[#allocation3 + $0x308] sm:$0xff]
    %v220 = vld [vmem:[#allocation3 + $0x310] sm:$0xff]
    %v221 = vld [vmem:[#allocation3 + $0x318] sm:$0xff]
    %v222 = vld [vmem:[#allocation3 + $0x320] sm:$0xff]
    %v223 = vld [vmem:[#allocation3 + $0x328] sm:$0xff]
    %v224 = vld [vmem:[#allocation3 + $0x330] sm:$0xff]
    %v225 = vld [vmem:[#allocation3 + $0x338] sm:$0xff]
    %v226 = vld [vmem:[#allocation3 + $0x340] sm:$0xff]
    %v227 = vld [vmem:[#allocation3 + $0x348] sm:$0xff]
    %v228 = vld [vmem:[#allocation3 + $0x350] sm:$0xff]
    %v229 = vld [vmem:[#allocation3 + $0x358] sm:$0xff]
    %v230 = vld [vmem:[#allocation3 + $0x360] sm:$0xff]
    %v231 = vld [vmem:[#allocation3 + $0x368] sm:$0xff]
    %v232 = vld [vmem:[#allocation3 + $0x370] sm:$0xff]
    %v233 = vld [vmem:[#allocation3 + $0x378] sm:$0xff]
    %v234 = vld [vmem:[#allocation3 + $0x380] sm:$0xff]
    %v235 = vld [vmem:[#allocation3 + $0x388] sm:$0xff]
    %v236 = vld [vmem:[#allocation3 + $0x390] sm:$0xff]
    %v237 = vld [vmem:[#allocation3 + $0x398] sm:$0xff]
    %v238 = vld [vmem:[#allocation3 + $0x3a0] sm:$0xff]
    %v239 = vld [vmem:[#allocation3 + $0x3a8] sm:$0xff]
    %v240 = vld [vmem:[#allocation3 + $0x3b0] sm:$0xff]
    %v241 = vld [vmem:[#allocation3 + $0x3b8] sm:$0xff]
    %v242 = vld [vmem:[#allocation3 + $0x3c0] sm:$0xff]
    %v243 = vld [vmem:[#allocation3 + $0x3c8] sm:$0xff]
    %v244 = vld [vmem:[#allocation3 + $0x3d0] sm:$0xff]
    %v245 = vld [vmem:[#allocation3 + $0x3d8] sm:$0xff]
    %v246 = vld [vmem:[#allocation3 + $0x3e0] sm:$0xff]
    %v247 = vld [vmem:[#allocation3 + $0x3e8] sm:$0xff]
    %v248 = vld [vmem:[#allocation3 + $0x3f0] sm:$0xff]
    %v249 = vld [vmem:[#allocation3 + $0x3f8] sm:$0xff]
    %v250 = vld [vmem:[#allocation3 + $0x400] sm:$0xff]
    %v251 = vld [vmem:[#allocation3 + $0x408] sm:$0xff]
    %v252 = vld [vmem:[#allocation3 + $0x410] sm:$0xff]
    %v253 = vld [vmem:[#allocation3 + $0x418] sm:$0xff]
    %v254 = vld [vmem:[#allocation3 + $0x420] sm:$0xff]
    %v255 = vld [vmem:[#allocation3 + $0x428] sm:$0xff]
    %v256 = vld [vmem:[#allocation3 + $0x430] sm:$0xff]
    %v257 = vld [vmem:[#allocation3 + $0x438] sm:$0xff]
    %v258 = vld [vmem:[#allocation3 + $0x440] sm:$0xff]
    %v259 = vld [vmem:[#allocation3 + $0x448] sm:$0xff]
    %v260 = vld [vmem:[#allocation3 + $0x450] sm:$0xff]
    %v261 = vld [vmem:[#allocation3 + $0x458] sm:$0xff]
    %v262 = vld [vmem:[#allocation3 + $0x460] sm:$0xff]
    %v263 = vld [vmem:[#allocation3 + $0x468] sm:$0xff]
    %v264 = vld [vmem:[#allocation3 + $0x470] sm:$0xff]
    %v265 = vld [vmem:[#allocation3 + $0x478] sm:$0xff]
    %v266 = vld [vmem:[#allocation3 + $0x480] sm:$0xff]
    %v267 = vld [vmem:[#allocation3 + $0x488] sm:$0xff]
    %v268 = vld [vmem:[#allocation3 + $0x490] sm:$0xff]
    %v269 = vld [vmem:[#allocation3 + $0x498] sm:$0xff]
    %v270 = vld [vmem:[#allocation3 + $0x4a0] sm:$0xff]
    %v271 = vld [vmem:[#allocation3 + $0x4a8] sm:$0xff]
    %v272 = vld [vmem:[#allocation3 + $0x4b0] sm:$0xff]
    %v273 = vld [vmem:[#allocation3 + $0x4b8] sm:$0xff]
    %v274 = vld [vmem:[#allocation3 + $0x4c0] sm:$0xff]
    %v275 = vld [vmem:[#allocation3 + $0x4c8] sm:$0xff]
    %v276 = vld [vmem:[#allocation3 + $0x4d0] sm:$0xff]
    %v277 = vld [vmem:[#allocation3 + $0x4d8] sm:$0xff]
    %v278 = vld [vmem:[#allocation3 + $0x4e0] sm:$0xff]
    %v279 = vld [vmem:[#allocation3 + $0x4e8] sm:$0xff]
    %v280 = vld [vmem:[#allocation3 + $0x4f0] sm:$0xff]
    %v281 = vld [vmem:[#allocation3 + $0x4f8] sm:$0xff]
    %v282 = vld [vmem:[#allocation3 + $0x500] sm:$0xff]
    %v283 = vld [vmem:[#allocation3 + $0x508] sm:$0xff]
    %v284 = vld [vmem:[#allocation3 + $0x510] sm:$0xff]
    %v285 = vld [vmem:[#allocation3 + $0x518] sm:$0xff]
    %v286 = vld [vmem:[#allocation3 + $0x520] sm:$0xff]
    %v287 = vld [vmem:[#allocation3 + $0x528] sm:$0xff]
    %v288 = vld [vmem:[#allocation3 + $0x530] sm:$0xff]
    %v289 = vld [vmem:[#allocation3 + $0x538] sm:$0xff]
    %v290 = vld [vmem:[#allocation3 + $0x540] sm:$0xff]
    %v291 = vld [vmem:[#allocation3 + $0x548] sm:$0xff]
    %v292 = vld [vmem:[#allocation3 + $0x550] sm:$0xff]
    %v293 = vld [vmem:[#allocation3 + $0x558] sm:$0xff]
    %v294 = vld [vmem:[#allocation3 + $0x560] sm:$0xff]
    %v295 = vld [vmem:[#allocation3 + $0x568] sm:$0xff]
    %v296 = vld [vmem:[#allocation3 + $0x570] sm:$0xff]
    %v297 = vld [vmem:[#allocation3 + $0x578] sm:$0xff]
    %v298 = vld [vmem:[#allocation3 + $0x580] sm:$0xff]
    %v299 = vld [vmem:[#allocation3 + $0x588] sm:$0xff]
    %v300 = vld [vmem:[#allocation3 + $0x590] sm:$0xff]
    %v301 = vld [vmem:[#allocation3 + $0x598] sm:$0xff]
    %v302 = vld [vmem:[#allocation3 + $0x5a0] sm:$0xff]
    %v303 = vld [vmem:[#allocation3 + $0x5a8] sm:$0xff]
    %v304 = vld [vmem:[#allocation3 + $0x5b0] sm:$0xff]
    %v305 = vld [vmem:[#allocation3 + $0x5b8] sm:$0xff]
    %v306 = vld [vmem:[#allocation3 + $0x5c0] sm:$0xff]
    %v307 = vld [vmem:[#allocation3 + $0x5c8] sm:$0xff]
    %v308 = vld [vmem:[#allocation3 + $0x5d0] sm:$0xff]
    %v309 = vld [vmem:[#allocation3 + $0x5d8] sm:$0xff]
    %v310 = vld [vmem:[#allocation3 + $0x5e0] sm:$0xff]
    %v311 = vld [vmem:[#allocation3 + $0x5e8] sm:$0xff]
    %v312 = vld [vmem:[#allocation3 + $0x5f0] sm:$0xff]
    %v313 = vld [vmem:[#allocation3 + $0x5f8] sm:$0xff]
    %v314 = vld [vmem:[#allocation3 + $0x600] sm:$0xff]
    %v315 = vld [vmem:[#allocation3 + $0x608] sm:$0xff]
    %v316 = vld [vmem:[#allocation3 + $0x610] sm:$0xff]
    %v317 = vld [vmem:[#allocation3 + $0x618] sm:$0xff]
    %v318 = vld [vmem:[#allocation3 + $0x620] sm:$0xff]
    %v319 = vld [vmem:[#allocation3 + $0x628] sm:$0xff]
    %v320 = vld [vmem:[#allocation3 + $0x630] sm:$0xff]
    %v321 = vld [vmem:[#allocation3 + $0x638] sm:$0xff]
    %v322 = vld [vmem:[#allocation3 + $0x640] sm:$0xff]
    %v323 = vld [vmem:[#allocation3 + $0x648] sm:$0xff]
    %v324 = vld [vmem:[#allocation3 + $0x650] sm:$0xff]
    %v325 = vld [vmem:[#allocation3 + $0x658] sm:$0xff]
    %v326 = vld [vmem:[#allocation3 + $0x660] sm:$0xff]
    %v327 = vld [vmem:[#allocation3 + $0x668] sm:$0xff]
    %v328 = vld [vmem:[#allocation3 + $0x670] sm:$0xff]
    %v329 = vld [vmem:[#allocation3 + $0x678] sm:$0xff]
    %v330 = vld [vmem:[#allocation3 + $0x680] sm:$0xff]
    %v331 = vld [vmem:[#allocation3 + $0x688] sm:$0xff]
    %v332 = vld [vmem:[#allocation3 + $0x690] sm:$0xff]
    %v333 = vld [vmem:[#allocation3 + $0x698] sm:$0xff]
    %v334 = vld [vmem:[#allocation3 + $0x6a0] sm:$0xff]
    %v335 = vld [vmem:[#allocation3 + $0x6a8] sm:$0xff]
    %v336 = vld [vmem:[#allocation3 + $0x6b0] sm:$0xff]
    %v337 = vld [vmem:[#allocation3 + $0x6b8] sm:$0xff]
    %v338 = vld [vmem:[#allocation3 + $0x6c0] sm:$0xff]
    %v339 = vld [vmem:[#allocation3 + $0x6c8] sm:$0xff]
    %v340 = vld [vmem:[#allocation3 + $0x6d0] sm:$0xff]
    %v341 = vld [vmem:[#allocation3 + $0x6d8] sm:$0xff]
    %v342 = vld [vmem:[#allocation3 + $0x6e0] sm:$0xff]
    %v343 = vld [vmem:[#allocation3 + $0x6e8] sm:$0xff]
    %v344 = vld [vmem:[#allocation3 + $0x6f0] sm:$0xff]
    %v345 = vld [vmem:[#allocation3 + $0x6f8] sm:$0xff]
    %v346 = vld [vmem:[#allocation3 + $0x700] sm:$0xff]
    %v347 = vld [vmem:[#allocation3 + $0x708] sm:$0xff]
    %v348 = vld [vmem:[#allocation3 + $0x710] sm:$0xff]
    %v349 = vld [vmem:[#allocation3 + $0x718] sm:$0xff]
    %v350 = vld [vmem:[#allocation3 + $0x720] sm:$0xff]
    %v351 = vld [vmem:[#allocation3 + $0x728] sm:$0xff]
    %v352 = vld [vmem:[#allocation3 + $0x730] sm:$0xff]
    %v353 = vld [vmem:[#allocation3 + $0x738] sm:$0xff]
    %v354 = vld [vmem:[#allocation3 + $0x740] sm:$0xff]
    %v355 = vld [vmem:[#allocation3 + $0x748] sm:$0xff]
    %v356 = vld [vmem:[#allocation3 + $0x750] sm:$0xff]
    %v357 = vld [vmem:[#allocation3 + $0x758] sm:$0xff]
    %v358 = vld [vmem:[#allocation3 + $0x760] sm:$0xff]
    %v359 = vld [vmem:[#allocation3 + $0x768] sm:$0xff]
    %v360 = vld [vmem:[#allocation3 + $0x770] sm:$0xff]
    %v361 = vld [vmem:[#allocation3 + $0x778] sm:$0xff]
    %v362 = vld [vmem:[#allocation3 + $0x780] sm:$0xff]
    %v363 = vld [vmem:[#allocation3 + $0x788] sm:$0xff]
    %v364 = vld [vmem:[#allocation3 + $0x790] sm:$0xff]
    %v365 = vld [vmem:[#allocation3 + $0x798] sm:$0xff]
    %v366 = vld [vmem:[#allocation3 + $0x7a0] sm:$0xff]
    %v367 = vld [vmem:[#allocation3 + $0x7a8] sm:$0xff]
    %v368 = vld [vmem:[#allocation3 + $0x7b0] sm:$0xff]
    %v369 = vld [vmem:[#allocation3 + $0x7b8] sm:$0xff]
    %v370 = vld [vmem:[#allocation3 + $0x7c0] sm:$0xff]
    %v371 = vld [vmem:[#allocation3 + $0x7c8] sm:$0xff]
    %v372 = vld [vmem:[#allocation3 + $0x7d0] sm:$0xff]
    %v373 = vld [vmem:[#allocation3 + $0x7d8] sm:$0xff]
    %v374 = vld [vmem:[#allocation3 + $0x7e0] sm:$0xff]
    %v375 = vld [vmem:[#allocation3 + $0x7e8] sm:$0xff]
    %v376 = vld [vmem:[#allocation3 + $0x7f0] sm:$0xff]
    %v377 = vld [vmem:[#allocation3 + $0x7f8] sm:$0xff]
    %v378 = vld [vmem:[%s5] sm:$0xff]
    %v379 = vld [vmem:[%s5 + $0x8] sm:$0xff]
    %v380 = vld [vmem:[%s5 + $0x10] sm:$0xff]
    %v381 = vld [vmem:[%s5 + $0x18] sm:$0xff]
    %v382 = vld [vmem:[%s5 + $0x20] sm:$0xff]
    %v383 = vld [vmem:[%s5 + $0x28] sm:$0xff]
    %v384 = vld [vmem:[%s5 + $0x30] sm:$0xff]
    %v385 = vld [vmem:[%s5 + $0x38] sm:$0xff]
    %v386 = vld [vmem:[%s5 + $0x40] sm:$0xff]
    %v387 = vld [vmem:[%s5 + $0x48] sm:$0xff]
    %v388 = vld [vmem:[%s5 + $0x50] sm:$0xff]
    %v389 = vld [vmem:[%s5 + $0x58] sm:$0xff]
    %v390 = vld [vmem:[%s5 + $0x60] sm:$0xff]
    %v391 = vld [vmem:[%s5 + $0x68] sm:$0xff]
    %v392 = vld [vmem:[%s5 + $0x70] sm:$0xff]
    %v393 = vld [vmem:[%s5 + $0x78] sm:$0xff]
    %v394 = vld [vmem:[%s5 + $0x80] sm:$0xff]
    %v395 = vld [vmem:[%s5 + $0x88] sm:$0xff]
    %v396 = vld [vmem:[%s5 + $0x90] sm:$0xff]
    %v397 = vld [vmem:[%s5 + $0x98] sm:$0xff]
    %v398 = vld [vmem:[%s5 + $0xa0] sm:$0xff]
    %v399 = vld [vmem:[%s5 + $0xa8] sm:$0xff]
    %v400 = vld [vmem:[%s5 + $0xb0] sm:$0xff]
    %v401 = vld [vmem:[%s5 + $0xb8] sm:$0xff]
    %v402 = vld [vmem:[%s5 + $0xc0] sm:$0xff]
    %v403 = vld [vmem:[%s5 + $0xc8] sm:$0xff]
    %v404 = vld [vmem:[%s5 + $0xd0] sm:$0xff]
    %v405 = vld [vmem:[%s5 + $0xd8] sm:$0xff]
    %v406 = vld [vmem:[%s5 + $0xe0] sm:$0xff]
    %v407 = vld [vmem:[%s5 + $0xe8] sm:$0xff]
    %v408 = vld [vmem:[%s5 + $0xf0] sm:$0xff]
    %v409 = vld [vmem:[%s5 + $0xf8] sm:$0xff]
    %v410 = vld [vmem:[%s7] sm:$0x1]
    %v412 = vlaneseq
    %v413 = vshrl.u32 %v412, 7
    %v414 = vsub.s32 0, %v413
    %v415 = vrot.slane %v410, %v414
    %417 = vmatprep.subr.mxu0 0.0
    %418 = vmatpush1.msra.mxu0 %v122
    %419 = vmatprep.subr.mxu0 0.0
    %420 = vmatpush1.msra.mxu0 %v123
    %421 = vmatprep.subr.mxu0 0.0
    %422 = vmatpush1.msra.mxu0 %v124
    %423 = vmatprep.subr.mxu0 0.0
    %424 = vmatpush1.msra.mxu0 %v125
    %425 = vmatprep.subr.mxu0 0.0
    %426 = vmatpush1.msra.mxu0 %v126
    %427 = vmatprep.subr.mxu0 0.0
    %428 = vmatpush1.msra.mxu0 %v127
    %429 = vmatprep.subr.mxu0 0.0
    %430 = vmatpush1.msra.mxu0 %v128
    %431 = vmatprep.subr.mxu0 0.0
    %432 = vmatpush1.msra.mxu0 %v129
    %433 = vmatprep.subr.mxu0 0.0
    %434 = vmatpush1.msra.mxu0 %v130
    %435 = vmatprep.subr.mxu0 0.0
    %436 = vmatpush1.msra.mxu0 %v131
    %437 = vmatprep.subr.mxu0 0.0
    %438 = vmatpush1.msra.mxu0 %v132
    %439 = vmatprep.subr.mxu0 0.0
    %440 = vmatpush1.msra.mxu0 %v133
    %441 = vmatprep.subr.mxu0 0.0
    %442 = vmatpush1.msra.mxu0 %v134
    %443 = vmatprep.subr.mxu0 0.0
    %444 = vmatpush1.msra.mxu0 %v135
    %445 = vmatprep.subr.mxu0 0.0
    %446 = vmatpush1.msra.mxu0 %v136
    %447 = vmatprep.subr.mxu0 0.0
    %448 = vmatpush1.msra.mxu0 %v137
    %449 = vmatprep.subr.mxu0 0.0
    %450 = vmatpush1.msra.mxu0 %v138
    %451 = vmatprep.subr.mxu0 0.0
    %452 = vmatpush1.msra.mxu0 %v139
    %453 = vmatprep.subr.mxu0 0.0
    %454 = vmatpush1.msra.mxu0 %v140
    %455 = vmatprep.subr.mxu0 0.0
    %456 = vmatpush1.msra.mxu0 %v141
    %457 = vmatprep.subr.mxu0 0.0
    %458 = vmatpush1.msra.mxu0 %v142
    %459 = vmatprep.subr.mxu0 0.0
    %460 = vmatpush1.msra.mxu0 %v143
    %461 = vmatprep.subr.mxu0 0.0
    %462 = vmatpush1.msra.mxu0 %v144
    %463 = vmatprep.subr.mxu0 0.0
    %464 = vmatpush1.msra.mxu0 %v145
    %465 = vmatprep.subr.mxu0 0.0
    %466 = vmatpush1.msra.mxu0 %v146
    %467 = vmatprep.subr.mxu0 0.0
    %468 = vmatpush1.msra.mxu0 %v147
    %469 = vmatprep.subr.mxu0 0.0
    %470 = vmatpush1.msra.mxu0 %v148
    %471 = vmatprep.subr.mxu0 0.0
    %472 = vmatpush1.msra.mxu0 %v149
    %473 = vmatprep.subr.mxu0 0.0
    %474 = vmatpush1.msra.mxu0 %v150
    %475 = vmatprep.subr.mxu0 0.0
    %476 = vmatpush1.msra.mxu0 %v151
    %477 = vmatprep.subr.mxu0 0.0
    %478 = vmatpush1.msra.mxu0 %v152
    %479 = vmatprep.subr.mxu0 0.0
    %480 = vmatpush1.msra.mxu0 %v153
    %481 = vmatprep.mubr.f32.mxu0 %v379
    %482 = vmatmul.mubr.f32.gmra.mrb[0].mxu0 %v378
    %v483 = vpop.f32.mrb[0].mxu0
    %v484 = vadd.f32 %v415, %v483
    %v485 = vpop.f32.mrb[0].mxu0
    %486 = vmatprep.mubr.f32.mxu0 %v395
    %487 = vmatmul.mubr.f32.gmra.mrb[0].mxu0 %v394
    %v488 = vpop.f32.mrb[0].mxu0
    %v489 = vadd.f32 %v415, %v488
    %v490 = vpop.f32.mrb[0].mxu0
    %491 = vdwg.mxu0
    %492 = vmatprep.subr.mxu0 0.0
    %493 = vmatpush1.msra.mxu0 %v154
    %494 = vmatprep.subr.mxu0 0.0
    %495 = vmatpush1.msra.mxu0 %v155
    %496 = vmatprep.subr.mxu0 0.0
    %497 = vmatpush1.msra.mxu0 %v156
    %498 = vmatprep.subr.mxu0 0.0
    %499 = vmatpush1.msra.mxu0 %v157
    %500 = vmatprep.subr.mxu0 0.0
    %501 = vmatpush1.msra.mxu0 %v158
    %502 = vmatprep.subr.mxu0 0.0
    %503 = vmatpush1.msra.mxu0 %v159
    %504 = vmatprep.subr.mxu0 0.0
    %505 = vmatpush1.msra.mxu0 %v160
    %506 = vmatprep.subr.mxu0 0.0
    %507 = vmatpush1.msra.mxu0 %v161
    %508 = vmatprep.subr.mxu0 0.0
    %509 = vmatpush1.msra.mxu0 %v162
    %510 = vmatprep.subr.mxu0 0.0
    %511 = vmatpush1.msra.mxu0 %v163
    %512 = vmatprep.subr.mxu0 0.0
    %513 = vmatpush1.msra.mxu0 %v164
    %514 = vmatprep.subr.mxu0 0.0
    %515 = vmatpush1.msra.mxu0 %v165
    %516 = vmatprep.subr.mxu0 0.0
    %517 = vmatpush1.msra.mxu0 %v166
    %518 = vmatprep.subr.mxu0 0.0
    %519 = vmatpush1.msra.mxu0 %v167
    %520 = vmatprep.subr.mxu0 0.0
    %521 = vmatpush1.msra.mxu0 %v168
    %522 = vmatprep.subr.mxu0 0.0
    %523 = vmatpush1.msra.mxu0 %v169
    %524 = vmatprep.subr.mxu0 0.0
    %525 = vmatpush1.msra.mxu0 %v170
    %526 = vmatprep.subr.mxu0 0.0
    %527 = vmatpush1.msra.mxu0 %v171
    %528 = vmatprep.subr.mxu0 0.0
    %529 = vmatpush1.msra.mxu0 %v172
    %530 = vmatprep.subr.mxu0 0.0
    %531 = vmatpush1.msra.mxu0 %v173
    %532 = vmatprep.subr.mxu0 0.0
    %533 = vmatpush1.msra.mxu0 %v174
    %534 = vmatprep.subr.mxu0 0.0
    %535 = vmatpush1.msra.mxu0 %v175
    %536 = vmatprep.subr.mxu0 0.0
    %537 = vmatpush1.msra.mxu0 %v176
    %538 = vmatprep.subr.mxu0 0.0
    %539 = vmatpush1.msra.mxu0 %v177
    %540 = vmatprep.subr.mxu0 0.0
    %541 = vmatpush1.msra.mxu0 %v178
    %542 = vmatprep.subr.mxu0 0.0
    %543 = vmatpush1.msra.mxu0 %v179
    %544 = vmatprep.subr.mxu0 0.0
    %545 = vmatpush1.msra.mxu0 %v180
    %546 = vmatprep.subr.mxu0 0.0
    %547 = vmatpush1.msra.mxu0 %v181
    %548 = vmatprep.subr.mxu0 0.0
    %549 = vmatpush1.msra.mxu0 %v182
    %550 = vmatprep.subr.mxu0 0.0
    %551 = vmatpush1.msra.mxu0 %v183
    %552 = vmatprep.subr.mxu0 0.0
    %553 = vmatpush1.msra.mxu0 %v184
    %554 = vmatprep.subr.mxu0 0.0
    %555 = vmatpush1.msra.mxu0 %v185
    %556 = vmatprep.mubr.f32.mxu0 %v381
    %557 = vmatmul.mubr.f32.gmra.mrb[0].mxu0 %v380
    %v558 = vpop.f32.mrb[0].mxu0
    %v559 = vadd.f32 %v484, %v558
    %v560 = vpop.f32.mrb[0].mxu0
    %561 = vmatprep.mubr.f32.mxu0 %v397
    %562 = vmatmul.mubr.f32.gmra.mrb[0].mxu0 %v396
    %v563 = vpop.f32.mrb[0].mxu0
    %v564 = vadd.f32 %v489, %v563
    %v565 = vpop.f32.mrb[0].mxu0
    %566 = vdwg.mxu0
    %567 = vmatprep.subr.mxu0 0.0
    %568 = vmatpush1.msra.mxu0 %v186
    %569 = vmatprep.subr.mxu0 0.0
    %570 = vmatpush1.msra.mxu0 %v187
    %571 = vmatprep.subr.mxu0 0.0
    %572 = vmatpush1.msra.mxu0 %v188
    %573 = vmatprep.subr.mxu0 0.0
    %574 = vmatpush1.msra.mxu0 %v189
    %575 = vmatprep.subr.mxu0 0.0
    %576 = vmatpush1.msra.mxu0 %v190
    %577 = vmatprep.subr.mxu0 0.0
    %578 = vmatpush1.msra.mxu0 %v191
    %579 = vmatprep.subr.mxu0 0.0
    %580 = vmatpush1.msra.mxu0 %v192
    %581 = vmatprep.subr.mxu0 0.0
    %582 = vmatpush1.msra.mxu0 %v193
    %583 = vmatprep.subr.mxu0 0.0
    %584 = vmatpush1.msra.mxu0 %v194
    %585 = vmatprep.subr.mxu0 0.0
    %586 = vmatpush1.msra.mxu0 %v195
    %587 = vmatprep.subr.mxu0 0.0
    %588 = vmatpush1.msra.mxu0 %v196
    %589 = vmatprep.subr.mxu0 0.0
    %590 = vmatpush1.msra.mxu0 %v197
    %591 = vmatprep.subr.mxu0 0.0
    %592 = vmatpush1.msra.mxu0 %v198
    %593 = vmatprep.subr.mxu0 0.0
    %594 = vmatpush1.msra.mxu0 %v199
    %595 = vmatprep.subr.mxu0 0.0
    %596 = vmatpush1.msra.mxu0 %v200
    %597 = vmatprep.subr.mxu0 0.0
    %598 = vmatpush1.msra.mxu0 %v201
    %599 = vmatprep.subr.mxu0 0.0
    %600 = vmatpush1.msra.mxu0 %v202
    %601 = vmatprep.subr.mxu0 0.0
    %602 = vmatpush1.msra.mxu0 %v203
    %603 = vmatprep.subr.mxu0 0.0
    %604 = vmatpush1.msra.mxu0 %v204
    %605 = vmatprep.subr.mxu0 0.0
    %606 = vmatpush1.msra.mxu0 %v205
    %607 = vmatprep.subr.mxu0 0.0
    %608 = vmatpush1.msra.mxu0 %v206
    %609 = vmatprep.subr.mxu0 0.0
    %610 = vmatpush1.msra.mxu0 %v207
    %611 = vmatprep.subr.mxu0 0.0
    %612 = vmatpush1.msra.mxu0 %v208
    %613 = vmatprep.subr.mxu0 0.0
    %614 = vmatpush1.msra.mxu0 %v209
    %615 = vmatprep.subr.mxu0 0.0
    %616 = vmatpush1.msra.mxu0 %v210
    %617 = vmatprep.subr.mxu0 0.0
    %618 = vmatpush1.msra.mxu0 %v211
    %619 = vmatprep.subr.mxu0 0.0
    %620 = vmatpush1.msra.mxu0 %v212
    %621 = vmatprep.subr.mxu0 0.0
    %622 = vmatpush1.msra.mxu0 %v213
    %623 = vmatprep.subr.mxu0 0.0
    %624 = vmatpush1.msra.mxu0 %v214
    %625 = vmatprep.subr.mxu0 0.0
    %626 = vmatpush1.msra.mxu0 %v215
    %627 = vmatprep.subr.mxu0 0.0
    %628 = vmatpush1.msra.mxu0 %v216
    %629 = vmatprep.subr.mxu0 0.0
    %630 = vmatpush1.msra.mxu0 %v217
    %631 = vmatprep.mubr.f32.mxu0 %v383
    %632 = vmatmul.mubr.f32.gmra.mrb[0].mxu0 %v382
    %v633 = vpop.f32.mrb[0].mxu0
    %v634 = vadd.f32 %v559, %v633
    %v635 = vpop.f32.mrb[0].mxu0
    %636 = vmatprep.mubr.f32.mxu0 %v399
    %637 = vmatmul.mubr.f32.gmra.mrb[0].mxu0 %v398
    %v638 = vpop.f32.mrb[0].mxu0
    %v639 = vadd.f32 %v564, %v638
    %v640 = vpop.f32.mrb[0].mxu0
    %641 = vdwg.mxu0
    %642 = vmatprep.subr.mxu0 0.0
    %643 = vmatpush1.msra.mxu0 %v218
    %644 = vmatprep.subr.mxu0 0.0
    %645 = vmatpush1.msra.mxu0 %v219
    %646 = vmatprep.subr.mxu0 0.0
    %647 = vmatpush1.msra.mxu0 %v220
    %648 = vmatprep.subr.mxu0 0.0
    %649 = vmatpush1.msra.mxu0 %v221
    %650 = vmatprep.subr.mxu0 0.0
    %651 = vmatpush1.msra.mxu0 %v222
    %652 = vmatprep.subr.mxu0 0.0
    %653 = vmatpush1.msra.mxu0 %v223
    %654 = vmatprep.subr.mxu0 0.0
    %655 = vmatpush1.msra.mxu0 %v224
    %656 = vmatprep.subr.mxu0 0.0
    %657 = vmatpush1.msra.mxu0 %v225
    %658 = vmatprep.subr.mxu0 0.0
    %659 = vmatpush1.msra.mxu0 %v226
    %660 = vmatprep.subr.mxu0 0.0
    %661 = vmatpush1.msra.mxu0 %v227
    %662 = vmatprep.subr.mxu0 0.0
    %663 = vmatpush1.msra.mxu0 %v228
    %664 = vmatprep.subr.mxu0 0.0
    %665 = vmatpush1.msra.mxu0 %v229
    %666 = vmatprep.subr.mxu0 0.0
    %667 = vmatpush1.msra.mxu0 %v230
    %668 = vmatprep.subr.mxu0 0.0
    %669 = vmatpush1.msra.mxu0 %v231
    %670 = vmatprep.subr.mxu0 0.0
    %671 = vmatpush1.msra.mxu0 %v232
    %672 = vmatprep.subr.mxu0 0.0
    %673 = vmatpush1.msra.mxu0 %v233
    %674 = vmatprep.subr.mxu0 0.0
    %675 = vmatpush1.msra.mxu0 %v234
    %676 = vmatprep.subr.mxu0 0.0
    %677 = vmatpush1.msra.mxu0 %v235
    %678 = vmatprep.subr.mxu0 0.0
    %679 = vmatpush1.msra.mxu0 %v236
    %680 = vmatprep.subr.mxu0 0.0
    %681 = vmatpush1.msra.mxu0 %v237
    %682 = vmatprep.subr.mxu0 0.0
    %683 = vmatpush1.msra.mxu0 %v238
    %684 = vmatprep.subr.mxu0 0.0
    %685 = vmatpush1.msra.mxu0 %v239
    %686 = vmatprep.subr.mxu0 0.0
    %687 = vmatpush1.msra.mxu0 %v240
    %688 = vmatprep.subr.mxu0 0.0
    %689 = vmatpush1.msra.mxu0 %v241
    %690 = vmatprep.subr.mxu0 0.0
    %691 = vmatpush1.msra.mxu0 %v242
    %692 = vmatprep.subr.mxu0 0.0
    %693 = vmatpush1.msra.mxu0 %v243
    %694 = vmatprep.subr.mxu0 0.0
    %695 = vmatpush1.msra.mxu0 %v244
    %696 = vmatprep.subr.mxu0 0.0
    %697 = vmatpush1.msra.mxu0 %v245
    %698 = vmatprep.subr.mxu0 0.0
    %699 = vmatpush1.msra.mxu0 %v246
    %700 = vmatprep.subr.mxu0 0.0
    %701 = vmatpush1.msra.mxu0 %v247
    %702 = vmatprep.subr.mxu0 0.0
    %703 = vmatpush1.msra.mxu0 %v248
    %704 = vmatprep.subr.mxu0 0.0
    %705 = vmatpush1.msra.mxu0 %v249
    %706 = vmatprep.mubr.f32.mxu0 %v385
    %707 = vmatmul.mubr.f32.gmra.mrb[0].mxu0 %v384
    %v708 = vpop.f32.mrb[0].mxu0
    %v709 = vadd.f32 %v634, %v708
    %v710 = vpop.f32.mrb[0].mxu0
    %711 = vmatprep.mubr.f32.mxu0 %v401
    %712 = vmatmul.mubr.f32.gmra.mrb[0].mxu0 %v400
    %v713 = vpop.f32.mrb[0].mxu0
    %v714 = vadd.f32 %v639, %v713
    %v715 = vpop.f32.mrb[0].mxu0
    %716 = vdwg.mxu0
    %717 = vmatprep.subr.mxu0 0.0
    %718 = vmatpush1.msra.mxu0 %v250
    %719 = vmatprep.subr.mxu0 0.0
    %720 = vmatpush1.msra.mxu0 %v251
    %721 = vmatprep.subr.mxu0 0.0
    %722 = vmatpush1.msra.mxu0 %v252
    %723 = vmatprep.subr.mxu0 0.0
    %724 = vmatpush1.msra.mxu0 %v253
    %725 = vmatprep.subr.mxu0 0.0
    %726 = vmatpush1.msra.mxu0 %v254
    %727 = vmatprep.subr.mxu0 0.0
    %728 = vmatpush1.msra.mxu0 %v255
    %729 = vmatprep.subr.mxu0 0.0
    %730 = vmatpush1.msra.mxu0 %v256
    %731 = vmatprep.subr.mxu0 0.0
    %732 = vmatpush1.msra.mxu0 %v257
    %733 = vmatprep.subr.mxu0 0.0
    %734 = vmatpush1.msra.mxu0 %v258
    %735 = vmatprep.subr.mxu0 0.0
    %736 = vmatpush1.msra.mxu0 %v259
    %737 = vmatprep.subr.mxu0 0.0
    %738 = vmatpush1.msra.mxu0 %v260
    %739 = vmatprep.subr.mxu0 0.0
    %740 = vmatpush1.msra.mxu0 %v261
    %741 = vmatprep.subr.mxu0 0.0
    %742 = vmatpush1.msra.mxu0 %v262
    %743 = vmatprep.subr.mxu0 0.0
    %744 = vmatpush1.msra.mxu0 %v263
    %745 = vmatprep.subr.mxu0 0.0
    %746 = vmatpush1.msra.mxu0 %v264
    %747 = vmatprep.subr.mxu0 0.0
    %748 = vmatpush1.msra.mxu0 %v265
    %749 = vmatprep.subr.mxu0 0.0
    %750 = vmatpush1.msra.mxu0 %v266
    %751 = vmatprep.subr.mxu0 0.0
    %752 = vmatpush1.msra.mxu0 %v267
    %753 = vmatprep.subr.mxu0 0.0
    %754 = vmatpush1.msra.mxu0 %v268
    %755 = vmatprep.subr.mxu0 0.0
    %756 = vmatpush1.msra.mxu0 %v269
    %757 = vmatprep.subr.mxu0 0.0
    %758 = vmatpush1.msra.mxu0 %v270
    %759 = vmatprep.subr.mxu0 0.0
    %760 = vmatpush1.msra.mxu0 %v271
    %761 = vmatprep.subr.mxu0 0.0
    %762 = vmatpush1.msra.mxu0 %v272
    %763 = vmatprep.subr.mxu0 0.0
    %764 = vmatpush1.msra.mxu0 %v273
    %765 = vmatprep.subr.mxu0 0.0
    %766 = vmatpush1.msra.mxu0 %v274
    %767 = vmatprep.subr.mxu0 0.0
    %768 = vmatpush1.msra.mxu0 %v275
    %769 = vmatprep.subr.mxu0 0.0
    %770 = vmatpush1.msra.mxu0 %v276
    %771 = vmatprep.subr.mxu0 0.0
    %772 = vmatpush1.msra.mxu0 %v277
    %773 = vmatprep.subr.mxu0 0.0
    %774 = vmatpush1.msra.mxu0 %v278
    %775 = vmatprep.subr.mxu0 0.0
    %776 = vmatpush1.msra.mxu0 %v279
    %777 = vmatprep.subr.mxu0 0.0
    %778 = vmatpush1.msra.mxu0 %v280
    %779 = vmatprep.subr.mxu0 0.0
    %780 = vmatpush1.msra.mxu0 %v281
    %781 = vmatprep.mubr.f32.mxu0 %v387
    %782 = vmatmul.mubr.f32.gmra.mrb[0].mxu0 %v386
    %v783 = vpop.f32.mrb[0].mxu0
    %v784 = vadd.f32 %v709, %v783
    %v785 = vpop.f32.mrb[0].mxu0
    %786 = vmatprep.mubr.f32.mxu0 %v403
    %787 = vmatmul.mubr.f32.gmra.mrb[0].mxu0 %v402
    %v788 = vpop.f32.mrb[0].mxu0
    %v789 = vadd.f32 %v714, %v788
    %v790 = vpop.f32.mrb[0].mxu0
    %791 = vdwg.mxu0
    %792 = vmatprep.subr.mxu0 0.0
    %793 = vmatpush1.msra.mxu0 %v282
    %794 = vmatprep.subr.mxu0 0.0
    %795 = vmatpush1.msra.mxu0 %v283
    %796 = vmatprep.subr.mxu0 0.0
    %797 = vmatpush1.msra.mxu0 %v284
    %798 = vmatprep.subr.mxu0 0.0
    %799 = vmatpush1.msra.mxu0 %v285
    %800 = vmatprep.subr.mxu0 0.0
    %801 = vmatpush1.msra.mxu0 %v286
    %802 = vmatprep.subr.mxu0 0.0
    %803 = vmatpush1.msra.mxu0 %v287
    %804 = vmatprep.subr.mxu0 0.0
    %805 = vmatpush1.msra.mxu0 %v288
    %806 = vmatprep.subr.mxu0 0.0
    %807 = vmatpush1.msra.mxu0 %v289
    %808 = vmatprep.subr.mxu0 0.0
    %809 = vmatpush1.msra.mxu0 %v290
    %810 = vmatprep.subr.mxu0 0.0
    %811 = vmatpush1.msra.mxu0 %v291
    %812 = vmatprep.subr.mxu0 0.0
    %813 = vmatpush1.msra.mxu0 %v292
    %814 = vmatprep.subr.mxu0 0.0
    %815 = vmatpush1.msra.mxu0 %v293
    %816 = vmatprep.subr.mxu0 0.0
    %817 = vmatpush1.msra.mxu0 %v294
    %818 = vmatprep.subr.mxu0 0.0
    %819 = vmatpush1.msra.mxu0 %v295
    %820 = vmatprep.subr.mxu0 0.0
    %821 = vmatpush1.msra.mxu0 %v296
    %822 = vmatprep.subr.mxu0 0.0
    %823 = vmatpush1.msra.mxu0 %v297
    %824 = vmatprep.subr.mxu0 0.0
    %825 = vmatpush1.msra.mxu0 %v298
    %826 = vmatprep.subr.mxu0 0.0
    %827 = vmatpush1.msra.mxu0 %v299
    %828 = vmatprep.subr.mxu0 0.0
    %829 = vmatpush1.msra.mxu0 %v300
    %830 = vmatprep.subr.mxu0 0.0
    %831 = vmatpush1.msra.mxu0 %v301
    %832 = vmatprep.subr.mxu0 0.0
    %833 = vmatpush1.msra.mxu0 %v302
    %834 = vmatprep.subr.mxu0 0.0
    %835 = vmatpush1.msra.mxu0 %v303
    %836 = vmatprep.subr.mxu0 0.0
    %837 = vmatpush1.msra.mxu0 %v304
    %838 = vmatprep.subr.mxu0 0.0
    %839 = vmatpush1.msra.mxu0 %v305
    %840 = vmatprep.subr.mxu0 0.0
    %841 = vmatpush1.msra.mxu0 %v306
    %842 = vmatprep.subr.mxu0 0.0
    %843 = vmatpush1.msra.mxu0 %v307
    %844 = vmatprep.subr.mxu0 0.0
    %845 = vmatpush1.msra.mxu0 %v308
    %846 = vmatprep.subr.mxu0 0.0
    %847 = vmatpush1.msra.mxu0 %v309
    %848 = vmatprep.subr.mxu0 0.0
    %849 = vmatpush1.msra.mxu0 %v310
    %850 = vmatprep.subr.mxu0 0.0
    %851 = vmatpush1.msra.mxu0 %v311
    %852 = vmatprep.subr.mxu0 0.0
    %853 = vmatpush1.msra.mxu0 %v312
    %854 = vmatprep.subr.mxu0 0.0
    %855 = vmatpush1.msra.mxu0 %v313
    %856 = vmatprep.mubr.f32.mxu0 %v389
    %857 = vmatmul.mubr.f32.gmra.mrb[0].mxu0 %v388
    %v858 = vpop.f32.mrb[0].mxu0
    %v859 = vadd.f32 %v784, %v858
    %v860 = vpop.f32.mrb[0].mxu0
    %861 = vmatprep.mubr.f32.mxu0 %v405
    %862 = vmatmul.mubr.f32.gmra.mrb[0].mxu0 %v404
    %v863 = vpop.f32.mrb[0].mxu0
    %v864 = vadd.f32 %v789, %v863
    %v865 = vpop.f32.mrb[0].mxu0
    %866 = vdwg.mxu0
    %867 = vmatprep.subr.mxu0 0.0
    %868 = vmatpush1.msra.mxu0 %v314
    %869 = vmatprep.subr.mxu0 0.0
    %870 = vmatpush1.msra.mxu0 %v315
    %871 = vmatprep.subr.mxu0 0.0
    %872 = vmatpush1.msra.mxu0 %v316
    %873 = vmatprep.subr.mxu0 0.0
    %874 = vmatpush1.msra.mxu0 %v317
    %875 = vmatprep.subr.mxu0 0.0
    %876 = vmatpush1.msra.mxu0 %v318
    %877 = vmatprep.subr.mxu0 0.0
    %878 = vmatpush1.msra.mxu0 %v319
    %879 = vmatprep.subr.mxu0 0.0
    %880 = vmatpush1.msra.mxu0 %v320
    %881 = vmatprep.subr.mxu0 0.0
    %882 = vmatpush1.msra.mxu0 %v321
    %883 = vmatprep.subr.mxu0 0.0
    %884 = vmatpush1.msra.mxu0 %v322
    %885 = vmatprep.subr.mxu0 0.0
    %886 = vmatpush1.msra.mxu0 %v323
    %887 = vmatprep.subr.mxu0 0.0
    %888 = vmatpush1.msra.mxu0 %v324
    %889 = vmatprep.subr.mxu0 0.0
    %890 = vmatpush1.msra.mxu0 %v325
    %891 = vmatprep.subr.mxu0 0.0
    %892 = vmatpush1.msra.mxu0 %v326
    %893 = vmatprep.subr.mxu0 0.0
    %894 = vmatpush1.msra.mxu0 %v327
    %895 = vmatprep.subr.mxu0 0.0
    %896 = vmatpush1.msra.mxu0 %v328
    %897 = vmatprep.subr.mxu0 0.0
    %898 = vmatpush1.msra.mxu0 %v329
    %899 = vmatprep.subr.mxu0 0.0
    %900 = vmatpush1.msra.mxu0 %v330
    %901 = vmatprep.subr.mxu0 0.0
    %902 = vmatpush1.msra.mxu0 %v331
    %903 = vmatprep.subr.mxu0 0.0
    %904 = vmatpush1.msra.mxu0 %v332
    %905 = vmatprep.subr.mxu0 0.0
    %906 = vmatpush1.msra.mxu0 %v333
    %907 = vmatprep.subr.mxu0 0.0
    %908 = vmatpush1.msra.mxu0 %v334
    %909 = vmatprep.subr.mxu0 0.0
    %910 = vmatpush1.msra.mxu0 %v335
    %911 = vmatprep.subr.mxu0 0.0
    %912 = vmatpush1.msra.mxu0 %v336
    %913 = vmatprep.subr.mxu0 0.0
    %914 = vmatpush1.msra.mxu0 %v337
    %915 = vmatprep.subr.mxu0 0.0
    %916 = vmatpush1.msra.mxu0 %v338
    %917 = vmatprep.subr.mxu0 0.0
    %918 = vmatpush1.msra.mxu0 %v339
    %919 = vmatprep.subr.mxu0 0.0
    %920 = vmatpush1.msra.mxu0 %v340
    %921 = vmatprep.subr.mxu0 0.0
    %922 = vmatpush1.msra.mxu0 %v341
    %923 = vmatprep.subr.mxu0 0.0
    %924 = vmatpush1.msra.mxu0 %v342
    %925 = vmatprep.subr.mxu0 0.0
    %926 = vmatpush1.msra.mxu0 %v343
    %927 = vmatprep.subr.mxu0 0.0
    %928 = vmatpush1.msra.mxu0 %v344
    %929 = vmatprep.subr.mxu0 0.0
    %930 = vmatpush1.msra.mxu0 %v345
    %931 = vmatprep.mubr.f32.mxu0 %v391
    %932 = vmatmul.mubr.f32.gmra.mrb[0].mxu0 %v390
    %v933 = vpop.f32.mrb[0].mxu0
    %v934 = vadd.f32 %v859, %v933
    %v935 = vpop.f32.mrb[0].mxu0
    %936 = vmatprep.mubr.f32.mxu0 %v407
    %937 = vmatmul.mubr.f32.gmra.mrb[0].mxu0 %v406
    %v938 = vpop.f32.mrb[0].mxu0
    %v939 = vadd.f32 %v864, %v938
    %v940 = vpop.f32.mrb[0].mxu0
    %941 = vdwg.mxu0
    %942 = vmatprep.subr.mxu0 0.0
    %943 = vmatpush1.msra.mxu0 %v346
    %944 = vmatprep.subr.mxu0 0.0
    %945 = vmatpush1.msra.mxu0 %v347
    %946 = vmatprep.subr.mxu0 0.0
    %947 = vmatpush1.msra.mxu0 %v348
    %948 = vmatprep.subr.mxu0 0.0
    %949 = vmatpush1.msra.mxu0 %v349
    %950 = vmatprep.subr.mxu0 0.0
    %951 = vmatpush1.msra.mxu0 %v350
    %952 = vmatprep.subr.mxu0 0.0
    %953 = vmatpush1.msra.mxu0 %v351
    %954 = vmatprep.subr.mxu0 0.0
    %955 = vmatpush1.msra.mxu0 %v352
    %956 = vmatprep.subr.mxu0 0.0
    %957 = vmatpush1.msra.mxu0 %v353
    %958 = vmatprep.subr.mxu0 0.0
    %959 = vmatpush1.msra.mxu0 %v354
    %960 = vmatprep.subr.mxu0 0.0
    %961 = vmatpush1.msra.mxu0 %v355
    %962 = vmatprep.subr.mxu0 0.0
    %963 = vmatpush1.msra.mxu0 %v356
    %964 = vmatprep.subr.mxu0 0.0
    %965 = vmatpush1.msra.mxu0 %v357
    %966 = vmatprep.subr.mxu0 0.0
    %967 = vmatpush1.msra.mxu0 %v358
    %968 = vmatprep.subr.mxu0 0.0
    %969 = vmatpush1.msra.mxu0 %v359
    %970 = vmatprep.subr.mxu0 0.0
    %971 = vmatpush1.msra.mxu0 %v360
    %972 = vmatprep.subr.mxu0 0.0
    %973 = vmatpush1.msra.mxu0 %v361
    %974 = vmatprep.subr.mxu0 0.0
    %975 = vmatpush1.msra.mxu0 %v362
    %976 = vmatprep.subr.mxu0 0.0
    %977 = vmatpush1.msra.mxu0 %v363
    %978 = vmatprep.subr.mxu0 0.0
    %979 = vmatpush1.msra.mxu0 %v364
    %980 = vmatprep.subr.mxu0 0.0
    %981 = vmatpush1.msra.mxu0 %v365
    %982 = vmatprep.subr.mxu0 0.0
    %983 = vmatpush1.msra.mxu0 %v366
    %984 = vmatprep.subr.mxu0 0.0
    %985 = vmatpush1.msra.mxu0 %v367
    %986 = vmatprep.subr.mxu0 0.0
    %987 = vmatpush1.msra.mxu0 %v368
    %988 = vmatprep.subr.mxu0 0.0
    %989 = vmatpush1.msra.mxu0 %v369
    %990 = vmatprep.subr.mxu0 0.0
    %991 = vmatpush1.msra.mxu0 %v370
    %992 = vmatprep.subr.mxu0 0.0
    %993 = vmatpush1.msra.mxu0 %v371
    %994 = vmatprep.subr.mxu0 0.0
    %995 = vmatpush1.msra.mxu0 %v372
    %996 = vmatprep.subr.mxu0 0.0
    %997 = vmatpush1.msra.mxu0 %v373
    %998 = vmatprep.subr.mxu0 0.0
    %999 = vmatpush1.msra.mxu0 %v374
    %1000 = vmatprep.subr.mxu0 0.0
    %1001 = vmatpush1.msra.mxu0 %v375
    %1002 = vmatprep.subr.mxu0 0.0
    %1003 = vmatpush1.msra.mxu0 %v376
    %1004 = vmatprep.subr.mxu0 0.0
    %1005 = vmatpush1.msra.mxu0 %v377
    %1006 = vmatprep.mubr.f32.mxu0 %v393
    %1007 = vmatmul.mubr.f32.gmra.mrb[0].mxu0 %v392
    %v1008 = vpop.f32.mrb[0].mxu0
    %v1009 = vadd.f32 %v934, %v1008
    %v1010 = vpop.f32.mrb[0].mxu0
    %1011 = vmatprep.mubr.f32.mxu0 %v409
    %1012 = vmatmul.mubr.f32.gmra.mrb[0].mxu0 %v408
    %v1013 = vpop.f32.mrb[0].mxu0
    %v1014 = vadd.f32 %v939, %v1013
    %v1015 = vpop.f32.mrb[0].mxu0
    %1016 = vdwg.mxu0
    %v1017 = vmax.f32 %v1009, 0.0
    %v1018 = vmax.f32 %v1014, 0.0
    %v1019 = vld [vmem:[%s8] sm:$0xff]
    %v1020 = vld [vmem:[%s8 + $0x8] sm:$0xff]
    %v1021 = vld [vmem:[%s8 + $0x10] sm:$0xff]
    %v1022 = vld [vmem:[%s8 + $0x18] sm:$0xff]
    %v1023 = vld [vmem:[%s8 + $0x20] sm:$0xff]
    %v1024 = vld [vmem:[%s8 + $0x28] sm:$0xff]
    %v1025 = vld [vmem:[%s8 + $0x30] sm:$0xff]
    %v1026 = vld [vmem:[%s8 + $0x38] sm:$0xff]
    %v1027 = vld [vmem:[%s8 + $0x40] sm:$0xff]
    %v1028 = vld [vmem:[%s8 + $0x48] sm:$0xff]
    %v1029 = vld [vmem:[%s8 + $0x50] sm:$0xff]
    %v1030 = vld [vmem:[%s8 + $0x58] sm:$0xff]
    %v1031 = vld [vmem:[%s8 + $0x60] sm:$0xff]
    %v1032 = vld [vmem:[%s8 + $0x68] sm:$0xff]
    %v1033 = vld [vmem:[%s8 + $0x70] sm:$0xff]
    %v1034 = vld [vmem:[%s8 + $0x78] sm:$0xff]
    %v1035 = vld [vmem:[#allocation5] sm:$0x1]
    %v1037 = vlaneseq
    %v1038 = vshrl.u32 %v1037, 7
    %v1039 = vsub.s32 0, %v1038
    %v1040 = vrot.slane %v1035, %v1039
    %1042 = vmatprep.subr.mxu0 0.0
    %1043 = vmatpush1.msra.mxu0 %v1019
    %1044 = vmatprep.subr.mxu0 0.0
    %1045 = vmatpush1.msra.mxu0 %v1020
    %1046 = vmatprep.subr.mxu0 0.0
    %1047 = vmatpush1.msra.mxu0 %v1021
    %1048 = vmatprep.subr.mxu0 0.0
    %1049 = vmatpush1.msra.mxu0 %v1022
    %1050 = vmatprep.subr.mxu0 0.0
    %1051 = vmatpush1.msra.mxu0 %v1023
    %1052 = vmatprep.subr.mxu0 0.0
    %1053 = vmatpush1.msra.mxu0 %v1024
    %1054 = vmatprep.subr.mxu0 0.0
    %1055 = vmatpush1.msra.mxu0 %v1025
    %1056 = vmatprep.subr.mxu0 0.0
    %1057 = vmatpush1.msra.mxu0 %v1026
    %1058 = vmatprep.subr.mxu0 0.0
    %1059 = vmatpush1.msra.mxu0 %v1027
    %1060 = vmatprep.subr.mxu0 0.0
    %1061 = vmatpush1.msra.mxu0 %v1028
    %1062 = vmatprep.subr.mxu0 0.0
    %1063 = vmatpush1.msra.mxu0 %v1029
    %1064 = vmatprep.subr.mxu0 0.0
    %1065 = vmatpush1.msra.mxu0 %v1030
    %1066 = vmatprep.subr.mxu0 0.0
    %1067 = vmatpush1.msra.mxu0 %v1031
    %1068 = vmatprep.subr.mxu0 0.0
    %1069 = vmatpush1.msra.mxu0 %v1032
    %1070 = vmatprep.subr.mxu0 0.0
    %1071 = vmatpush1.msra.mxu0 %v1033
    %1072 = vmatprep.subr.mxu0 0.0
    %1073 = vmatpush1.msra.mxu0 %v1034
    %1074 = vmatprep.subr.mxu0 0.0
    %1075 = vmatpush1.msra.mxu0 0.0
    %1076 = vmatprep.subr.mxu0 0.0
    %1077 = vmatpush1.msra.mxu0 0.0
    %1078 = vmatprep.subr.mxu0 0.0
    %1079 = vmatpush1.msra.mxu0 0.0
    %1080 = vmatprep.subr.mxu0 0.0
    %1081 = vmatpush1.msra.mxu0 0.0
    %1082 = vmatprep.subr.mxu0 0.0
    %1083 = vmatpush1.msra.mxu0 0.0
    %1084 = vmatprep.subr.mxu0 0.0
    %1085 = vmatpush1.msra.mxu0 0.0
    %1086 = vmatprep.subr.mxu0 0.0
    %1087 = vmatpush1.msra.mxu0 0.0
    %1088 = vmatprep.subr.mxu0 0.0
    %1089 = vmatpush1.msra.mxu0 0.0
    %1090 = vmatprep.subr.mxu0 0.0
    %1091 = vmatpush1.msra.mxu0 0.0
    %1092 = vmatprep.subr.mxu0 0.0
    %1093 = vmatpush1.msra.mxu0 0.0
    %1094 = vmatprep.subr.mxu0 0.0
    %1095 = vmatpush1.msra.mxu0 0.0
    %1096 = vmatprep.subr.mxu0 0.0
    %1097 = vmatpush1.msra.mxu0 0.0
    %1098 = vmatprep.subr.mxu0 0.0
    %1099 = vmatpush1.msra.mxu0 0.0
    %1100 = vmatprep.subr.mxu0 0.0
    %1101 = vmatpush1.msra.mxu0 0.0
    %1102 = vmatprep.subr.mxu0 0.0
    %1103 = vmatpush1.msra.mxu0 0.0
    %1104 = vmatprep.subr.mxu0 0.0
    %1105 = vmatpush1.msra.mxu0 0.0
    %1106 = vmatprep.mubr.f32.mxu0 0.0
    %1107 = vmatmul.mubr.f32.gmra.mrb[0].mxu0 %v1017
    %v1108 = vpop.f32.mrb[0].mxu0
    %v1109 = vadd.f32 %v1040, %v1108
    %v1110 = vpop.f32.mrb[0].mxu0
    %1111 = vmatprep.mubr.f32.mxu0 0.0
    %1112 = vmatmul.mubr.f32.gmra.mrb[0].mxu0 %v1018
    %v1113 = vpop.f32.mrb[0].mxu0
    %v1114 = vadd.f32 %v1040, %v1113
    %v1115 = vpop.f32.mrb[0].mxu0
    %1116 = vdwg.mxu0
    %v1117 = vld [vmem:[%s0] sm:$0xff]
    %v1118 = vld [vmem:[%s0 + $0x8] sm:$0xff]
    %v1119 = vld [vmem:[%s1] sm:$0xff]
    %v1120 = vld [vmem:[%s1 + $0x8] sm:$0xff]
    %v1121 = vmul.f32 %v1117, %v1119
    %v1122 = vmul.f32 %v1118, %v1120
    %v1123 = vld [vmem:[%s2] sm:$0xff]
    %v1124 = vld [vmem:[%s2 + $0x8] sm:$0xff]
    %v1125 = vld [vmem:[%s10] sm:$0xff]
    %v1126 = vld [vmem:[%s10 + $0x8] sm:$0xff]
    %v1127 = vld [vmem:[%s3] sm:$0xff]
    %v1128 = vld [vmem:[%s3 + $0x8] sm:$0xff]
    %v1129 = vld [vmem:[%s11] sm:$0xff]
    %v1130 = vld [vmem:[%s11 + $0x8] sm:$0xff]
    %vm1131 = vcmask 130048
    %v1133 = vsel %vm1131, %v1127, 0
    %v1136 = vsel %vm1131, %v1128, 0
    %1138 = vmatprep.subr.mxu0 0.0
    %1139 = vmatpush1.msra.mxu0 %v1129
    %1140 = vmatprep.subr.mxu0 0.0
    %1141 = vmatpush1.msra.mxu0 %v1130
    %1142 = vmatprep.subr.mxu0 0.0
    %1143 = vmatpush1.msra.mxu0 0.0
    %1144 = vmatprep.subr.mxu0 0.0
    %1145 = vmatpush1.msra.mxu0 0.0
    %1146 = vmatprep.subr.mxu0 0.0
    %1147 = vmatpush1.msra.mxu0 0.0
    %1148 = vmatprep.subr.mxu0 0.0
    %1149 = vmatpush1.msra.mxu0 0.0
    %1150 = vmatprep.subr.mxu0 0.0
    %1151 = vmatpush1.msra.mxu0 0.0
    %1152 = vmatprep.subr.mxu0 0.0
    %1153 = vmatpush1.msra.mxu0 0.0
    %1154 = vmatprep.subr.mxu0 0.0
    %1155 = vmatpush1.msra.mxu0 0.0
    %1156 = vmatprep.subr.mxu0 0.0
    %1157 = vmatpush1.msra.mxu0 0.0
    %1158 = vmatprep.subr.mxu0 0.0
    %1159 = vmatpush1.msra.mxu0 0.0
    %1160 = vmatprep.subr.mxu0 0.0
    %1161 = vmatpush1.msra.mxu0 0.0
    %1162 = vmatprep.subr.mxu0 0.0
    %1163 = vmatpush1.msra.mxu0 0.0
    %1164 = vmatprep.subr.mxu0 0.0
    %1165 = vmatpush1.msra.mxu0 0.0
    %1166 = vmatprep.subr.mxu0 0.0
    %1167 = vmatpush1.msra.mxu0 0.0
    %1168 = vmatprep.subr.mxu0 0.0
    %1169 = vmatpush1.msra.mxu0 0.0
    %1170 = vmatprep.subr.mxu0 0.0
    %1171 = vmatpush1.msra.mxu0 0.0
    %1172 = vmatprep.subr.mxu0 0.0
    %1173 = vmatpush1.msra.mxu0 0.0
    %1174 = vmatprep.subr.mxu0 0.0
    %1175 = vmatpush1.msra.mxu0 0.0
    %1176 = vmatprep.subr.mxu0 0.0
    %1177 = vmatpush1.msra.mxu0 0.0
    %1178 = vmatprep.subr.mxu0 0.0
    %1179 = vmatpush1.msra.mxu0 0.0
    %1180 = vmatprep.subr.mxu0 0.0
    %1181 = vmatpush1.msra.mxu0 0.0
    %1182 = vmatprep.subr.mxu0 0.0
    %1183 = vmatpush1.msra.mxu0 0.0
    %1184 = vmatprep.subr.mxu0 0.0
    %1185 = vmatpush1.msra.mxu0 0.0
    %1186 = vmatprep.subr.mxu0 0.0
    %1187 = vmatpush1.msra.mxu0 0.0
    %1188 = vmatprep.subr.mxu0 0.0
    %1189 = vmatpush1.msra.mxu0 0.0
    %1190 = vmatprep.subr.mxu0 0.0
    %1191 = vmatpush1.msra.mxu0 0.0
    %1192 = vmatprep.subr.mxu0 0.0
    %1193 = vmatpush1.msra.mxu0 0.0
    %1194 = vmatprep.subr.mxu0 0.0
    %1195 = vmatpush1.msra.mxu0 0.0
    %1196 = vmatprep.subr.mxu0 0.0
    %1197 = vmatpush1.msra.mxu0 0.0
    %1198 = vmatprep.subr.mxu0 0.0
    %1199 = vmatpush1.msra.mxu0 0.0
    %1200 = vmatprep.subr.mxu0 0.0
    %1201 = vmatpush1.msra.mxu0 0.0
    %1202 = vmatprep.mubr.f32.mxu0 0.0
    %1203 = vmatmul.mubr.f32.gmra.mrb[0].mxu0 %v1133
    %v1204 = vpop.f32.mrb[0].mxu0
    %v1205 = vadd.f32 0.0, %v1204
    %v1206 = vpop.f32.mrb[0].mxu0
    %1207 = vmatprep.mubr.f32.mxu0 0.0
    %1208 = vmatmul.mubr.f32.gmra.mrb[0].mxu0 %v1136
    %v1209 = vpop.f32.mrb[0].mxu0
    %v1210 = vadd.f32 0.0, %v1209
    %v1211 = vpop.f32.mrb[0].mxu0
    %1212 = vdwg.mxu0
    %v1214 = vsel %vm1131, %v1123, 0
    %v1217 = vsel %vm1131, %v1124, 0
    %1219 = vmatprep.subr.mxu0 0.0
    %1220 = vmatpush1.msra.mxu0 %v1125
    %1221 = vmatprep.subr.mxu0 0.0
    %1222 = vmatpush1.msra.mxu0 %v1126
    %1223 = vmatprep.subr.mxu0 0.0
    %1224 = vmatpush1.msra.mxu0 0.0
    %1225 = vmatprep.subr.mxu0 0.0
    %1226 = vmatpush1.msra.mxu0 0.0
    %1227 = vmatprep.subr.mxu0 0.0
    %1228 = vmatpush1.msra.mxu0 0.0
    %1229 = vmatprep.subr.mxu0 0.0
    %1230 = vmatpush1.msra.mxu0 0.0
    %1231 = vmatprep.subr.mxu0 0.0
    %1232 = vmatpush1.msra.mxu0 0.0
    %1233 = vmatprep.subr.mxu0 0.0
    %1234 = vmatpush1.msra.mxu0 0.0
    %1235 = vmatprep.subr.mxu0 0.0
    %1236 = vmatpush1.msra.mxu0 0.0
    %1237 = vmatprep.subr.mxu0 0.0
    %1238 = vmatpush1.msra.mxu0 0.0
    %1239 = vmatprep.subr.mxu0 0.0
    %1240 = vmatpush1.msra.mxu0 0.0
    %1241 = vmatprep.subr.mxu0 0.0
    %1242 = vmatpush1.msra.mxu0 0.0
    %1243 = vmatprep.subr.mxu0 0.0
    %1244 = vmatpush1.msra.mxu0 0.0
    %1245 = vmatprep.subr.mxu0 0.0
    %1246 = vmatpush1.msra.mxu0 0.0
    %1247 = vmatprep.subr.mxu0 0.0
    %1248 = vmatpush1.msra.mxu0 0.0
    %1249 = vmatprep.subr.mxu0 0.0
    %1250 = vmatpush1.msra.mxu0 0.0
    %1251 = vmatprep.subr.mxu0 0.0
    %1252 = vmatpush1.msra.mxu0 0.0
    %1253 = vmatprep.subr.mxu0 0.0
    %1254 = vmatpush1.msra.mxu0 0.0
    %1255 = vmatprep.subr.mxu0 0.0
    %1256 = vmatpush1.msra.mxu0 0.0
    %1257 = vmatprep.subr.mxu0 0.0
    %1258 = vmatpush1.msra.mxu0 0.0
    %1259 = vmatprep.subr.mxu0 0.0
    %1260 = vmatpush1.msra.mxu0 0.0
    %1261 = vmatprep.subr.mxu0 0.0
    %1262 = vmatpush1.msra.mxu0 0.0
    %1263 = vmatprep.subr.mxu0 0.0
    %1264 = vmatpush1.msra.mxu0 0.0
    %1265 = vmatprep.subr.mxu0 0.0
    %1266 = vmatpush1.msra.mxu0 0.0
    %1267 = vmatprep.subr.mxu0 0.0
    %1268 = vmatpush1.msra.mxu0 0.0
    %1269 = vmatprep.subr.mxu0 0.0
    %1270 = vmatpush1.msra.mxu0 0.0
    %1271 = vmatprep.subr.mxu0 0.0
    %1272 = vmatpush1.msra.mxu0 0.0
    %1273 = vmatprep.subr.mxu0 0.0
    %1274 = vmatpush1.msra.mxu0 0.0
    %1275 = vmatprep.subr.mxu0 0.0
    %1276 = vmatpush1.msra.mxu0 0.0
    %1277 = vmatprep.subr.mxu0 0.0
    %1278 = vmatpush1.msra.mxu0 0.0
    %1279 = vmatprep.subr.mxu0 0.0
    %1280 = vmatpush1.msra.mxu0 0.0
    %1281 = vmatprep.subr.mxu0 0.0
    %1282 = vmatpush1.msra.mxu0 0.0
    %1283 = vmatprep.mubr.f32.mxu0 0.0
    %1284 = vmatmul.mubr.f32.gmra.mrb[0].mxu0 %v1214
    %v1285 = vpop.f32.mrb[0].mxu0
    %v1286 = vadd.f32 %v1205, %v1285
    %v1287 = vpop.f32.mrb[0].mxu0
    %1288 = vmatprep.mubr.f32.mxu0 0.0
    %1289 = vmatmul.mubr.f32.gmra.mrb[0].mxu0 %v1217
    %v1290 = vpop.f32.mrb[0].mxu0
    %v1291 = vadd.f32 %v1210, %v1290
    %v1292 = vpop.f32.mrb[0].mxu0
    %1293 = vdwg.mxu0
    %v1294 = vld [vmem:[#allocation7] sm:$0x1]
    %v1296 = vlaneseq
    %v1297 = vshrl.u32 %v1296, 7
    %v1298 = vsub.s32 0, %v1297
    %v1299 = vrot.slane %v1294, %v1298
    %v1301 = vadd.f32 %v1286, %v1299
    %v1302 = vadd.f32 %v1291, %v1299
    %v1303 = vmax.f32 %v1301, 0.0
    %v1304 = vmax.f32 %v1302, 0.0
    %v1305 = vld [vmem:[%s13] sm:$0xff]
    %v1306 = vld [vmem:[%s13 + $0x8] sm:$0xff]
    %v1307 = vld [vmem:[%s13 + $0x10] sm:$0xff]
    %v1308 = vld [vmem:[%s13 + $0x18] sm:$0xff]
    %v1309 = vld [vmem:[%s13 + $0x20] sm:$0xff]
    %v1310 = vld [vmem:[%s13 + $0x28] sm:$0xff]
    %v1311 = vld [vmem:[%s13 + $0x30] sm:$0xff]
    %v1312 = vld [vmem:[%s13 + $0x38] sm:$0xff]
    %v1313 = vld [vmem:[%s14] sm:$0x1]
    %v1315 = vlaneseq
    %v1316 = vshrl.u32 %v1315, 7
    %v1317 = vsub.s32 0, %v1316
    %v1318 = vrot.slane %v1313, %v1317
    %vm1320 = vcmask 523264
    %v1322 = vsel %vm1320, %v1303, 0
    %v1325 = vsel %vm1320, %v1304, 0
    %1327 = vmatprep.subr.mxu0 0.0
    %1328 = vmatpush1.msra.mxu0 %v1305
    %1329 = vmatprep.subr.mxu0 0.0
    %1330 = vmatpush1.msra.mxu0 %v1306
    %1331 = vmatprep.subr.mxu0 0.0
    %1332 = vmatpush1.msra.mxu0 %v1307
    %1333 = vmatprep.subr.mxu0 0.0
    %1334 = vmatpush1.msra.mxu0 %v1308
    %1335 = vmatprep.subr.mxu0 0.0
    %1336 = vmatpush1.msra.mxu0 %v1309
    %1337 = vmatprep.subr.mxu0 0.0
    %1338 = vmatpush1.msra.mxu0 %v1310
    %1339 = vmatprep.subr.mxu0 0.0
    %1340 = vmatpush1.msra.mxu0 %v1311
    %1341 = vmatprep.subr.mxu0 0.0
    %1342 = vmatpush1.msra.mxu0 %v1312
    %1343 = vmatprep.subr.mxu0 0.0
    %1344 = vmatpush1.msra.mxu0 0.0
    %1345 = vmatprep.subr.mxu0 0.0
    %1346 = vmatpush1.msra.mxu0 0.0
    %1347 = vmatprep.subr.mxu0 0.0
    %1348 = vmatpush1.msra.mxu0 0.0
    %1349 = vmatprep.subr.mxu0 0.0
    %1350 = vmatpush1.msra.mxu0 0.0
    %1351 = vmatprep.subr.mxu0 0.0
    %1352 = vmatpush1.msra.mxu0 0.0
    %1353 = vmatprep.subr.mxu0 0.0
    %1354 = vmatpush1.msra.mxu0 0.0
    %1355 = vmatprep.subr.mxu0 0.0
    %1356 = vmatpush1.msra.mxu0 0.0
    %1357 = vmatprep.subr.mxu0 0.0
    %1358 = vmatpush1.msra.mxu0 0.0
    %1359 = vmatprep.subr.mxu0 0.0
    %1360 = vmatpush1.msra.mxu0 0.0
    %1361 = vmatprep.subr.mxu0 0.0
    %1362 = vmatpush1.msra.mxu0 0.0
    %1363 = vmatprep.subr.mxu0 0.0
    %1364 = vmatpush1.msra.mxu0 0.0
    %1365 = vmatprep.subr.mxu0 0.0
    %1366 = vmatpush1.msra.mxu0 0.0
    %1367 = vmatprep.subr.mxu0 0.0
    %1368 = vmatpush1.msra.mxu0 0.0
    %1369 = vmatprep.subr.mxu0 0.0
    %1370 = vmatpush1.msra.mxu0 0.0
    %1371 = vmatprep.subr.mxu0 0.0
    %1372 = vmatpush1.msra.mxu0 0.0
    %1373 = vmatprep.subr.mxu0 0.0
    %1374 = vmatpush1.msra.mxu0 0.0
    %1375 = vmatprep.subr.mxu0 0.0
    %1376 = vmatpush1.msra.mxu0 0.0
    %1377 = vmatprep.subr.mxu0 0.0
    %1378 = vmatpush1.msra.mxu0 0.0
    %1379 = vmatprep.subr.mxu0 0.0
    %1380 = vmatpush1.msra.mxu0 0.0
    %1381 = vmatprep.subr.mxu0 0.0
    %1382 = vmatpush1.msra.mxu0 0.0
    %1383 = vmatprep.subr.mxu0 0.0
    %1384 = vmatpush1.msra.mxu0 0.0
    %1385 = vmatprep.subr.mxu0 0.0
    %1386 = vmatpush1.msra.mxu0 0.0
    %1387 = vmatprep.subr.mxu0 0.0
    %1388 = vmatpush1.msra.mxu0 0.0
    %1389 = vmatprep.subr.mxu0 0.0
    %1390 = vmatpush1.msra.mxu0 0.0
    %1391 = vmatprep.mubr.f32.mxu0 0.0
    %1392 = vmatmul.mubr.f32.gmra.mrb[0].mxu0 %v1322
    %v1393 = vpop.f32.mrb[0].mxu0
    %v1394 = vadd.f32 %v1318, %v1393
    %v1395 = vpop.f32.mrb[0].mxu0
    %1396 = vmatprep.mubr.f32.mxu0 0.0
    %1397 = vmatmul.mubr.f32.gmra.mrb[0].mxu0 %v1325
    %v1398 = vpop.f32.mrb[0].mxu0
    %v1399 = vadd.f32 %v1318, %v1398
    %v1400 = vpop.f32.mrb[0].mxu0
    %1401 = vdwg.mxu0
    %v1402 = vmax.f32 %v1394, 0.0
    %v1403 = vmax.f32 %v1399, 0.0
    %v1404 = vld [vmem:[%s15] sm:$0xff]
    %v1405 = vld [vmem:[%s15 + $0x8] sm:$0xff]
    %v1406 = vld [vmem:[%s15 + $0x10] sm:$0xff]
    %v1407 = vld [vmem:[%s15 + $0x18] sm:$0xff]
    %v1408 = vld [vmem:[%s16] sm:$0x1]
    %v1410 = vlaneseq
    %v1411 = vshrl.u32 %v1410, 7
    %v1412 = vsub.s32 0, %v1411
    %v1413 = vrot.slane %v1408, %v1412
    %vm1415 = vcmask 261120
    %v1417 = vsel %vm1415, %v1402, 0
    %v1420 = vsel %vm1415, %v1403, 0
    %1422 = vmatprep.subr.mxu0 0.0
    %1423 = vmatpush1.msra.mxu0 %v1404
    %1424 = vmatprep.subr.mxu0 0.0
    %1425 = vmatpush1.msra.mxu0 %v1405
    %1426 = vmatprep.subr.mxu0 0.0
    %1427 = vmatpush1.msra.mxu0 %v1406
    %1428 = vmatprep.subr.mxu0 0.0
    %1429 = vmatpush1.msra.mxu0 %v1407
    %1430 = vmatprep.subr.mxu0 0.0
    %1431 = vmatpush1.msra.mxu0 0.0
    %1432 = vmatprep.subr.mxu0 0.0
    %1433 = vmatpush1.msra.mxu0 0.0
    %1434 = vmatprep.subr.mxu0 0.0
    %1435 = vmatpush1.msra.mxu0 0.0
    %1436 = vmatprep.subr.mxu0 0.0
    %1437 = vmatpush1.msra.mxu0 0.0
    %1438 = vmatprep.subr.mxu0 0.0
    %1439 = vmatpush1.msra.mxu0 0.0
    %1440 = vmatprep.subr.mxu0 0.0
    %1441 = vmatpush1.msra.mxu0 0.0
    %1442 = vmatprep.subr.mxu0 0.0
    %1443 = vmatpush1.msra.mxu0 0.0
    %1444 = vmatprep.subr.mxu0 0.0
    %1445 = vmatpush1.msra.mxu0 0.0
    %1446 = vmatprep.subr.mxu0 0.0
    %1447 = vmatpush1.msra.mxu0 0.0
    %1448 = vmatprep.subr.mxu0 0.0
    %1449 = vmatpush1.msra.mxu0 0.0
    %1450 = vmatprep.subr.mxu0 0.0
    %1451 = vmatpush1.msra.mxu0 0.0
    %1452 = vmatprep.subr.mxu0 0.0
    %1453 = vmatpush1.msra.mxu0 0.0
    %1454 = vmatprep.subr.mxu0 0.0
    %1455 = vmatpush1.msra.mxu0 0.0
    %1456 = vmatprep.subr.mxu0 0.0
    %1457 = vmatpush1.msra.mxu0 0.0
    %1458 = vmatprep.subr.mxu0 0.0
    %1459 = vmatpush1.msra.mxu0 0.0
    %1460 = vmatprep.subr.mxu0 0.0
    %1461 = vmatpush1.msra.mxu0 0.0
    %1462 = vmatprep.subr.mxu0 0.0
    %1463 = vmatpush1.msra.mxu0 0.0
    %1464 = vmatprep.subr.mxu0 0.0
    %1465 = vmatpush1.msra.mxu0 0.0
    %1466 = vmatprep.subr.mxu0 0.0
    %1467 = vmatpush1.msra.mxu0 0.0
    %1468 = vmatprep.subr.mxu0 0.0
    %1469 = vmatpush1.msra.mxu0 0.0
    %1470 = vmatprep.subr.mxu0 0.0
    %1471 = vmatpush1.msra.mxu0 0.0
    %1472 = vmatprep.subr.mxu0 0.0
    %1473 = vmatpush1.msra.mxu0 0.0
    %1474 = vmatprep.subr.mxu0 0.0
    %1475 = vmatpush1.msra.mxu0 0.0
    %1476 = vmatprep.subr.mxu0 0.0
    %1477 = vmatpush1.msra.mxu0 0.0
    %1478 = vmatprep.subr.mxu0 0.0
    %1479 = vmatpush1.msra.mxu0 0.0
    %1480 = vmatprep.subr.mxu0 0.0
    %1481 = vmatpush1.msra.mxu0 0.0
    %1482 = vmatprep.subr.mxu0 0.0
    %1483 = vmatpush1.msra.mxu0 0.0
    %1484 = vmatprep.subr.mxu0 0.0
    %1485 = vmatpush1.msra.mxu0 0.0
    %1486 = vmatprep.mubr.f32.mxu0 0.0
    %1487 = vmatmul.mubr.f32.gmra.mrb[0].mxu0 %v1417
    %v1488 = vpop.f32.mrb[0].mxu0
    %v1489 = vadd.f32 %v1413, %v1488
    %v1490 = vpop.f32.mrb[0].mxu0
    %1491 = vmatprep.mubr.f32.mxu0 0.0
    %1492 = vmatmul.mubr.f32.gmra.mrb[0].mxu0 %v1420
    %v1493 = vpop.f32.mrb[0].mxu0
    %v1494 = vadd.f32 %v1413, %v1493
    %v1495 = vpop.f32.mrb[0].mxu0
    %1496 = vdwg.mxu0
    %v1497 = vmax.f32 %v1489, 0.0
    %v1498 = vmax.f32 %v1494, 0.0
    %v1499 = vld [vmem:[%s4] sm:$0xff]
    %v1500 = vld [vmem:[%s4 + $0x8] sm:$0xff]
    %v1501 = vld [vmem:[%s17] sm:$0xff]
    %v1502 = vld [vmem:[%s17 + $0x8] sm:$0xff]
    %v1503 = vld [vmem:[%s18] sm:$0xff]
    %v1504 = vld [vmem:[%s18 + $0x8] sm:$0xff]
    %v1506 = vsel %vm1131, %v1109, 0
    %v1509 = vsel %vm1131, %v1114, 0
    %1511 = vmatprep.subr.mxu0 0.0
    %1512 = vmatpush1.msra.mxu0 %v1503
    %1513 = vmatprep.subr.mxu0 0.0
    %1514 = vmatpush1.msra.mxu0 %v1504
    %1515 = vmatprep.subr.mxu0 0.0
    %1516 = vmatpush1.msra.mxu0 0.0
    %1517 = vmatprep.subr.mxu0 0.0
    %1518 = vmatpush1.msra.mxu0 0.0
    %1519 = vmatprep.subr.mxu0 0.0
    %1520 = vmatpush1.msra.mxu0 0.0
    %1521 = vmatprep.subr.mxu0 0.0
    %1522 = vmatpush1.msra.mxu0 0.0
    %1523 = vmatprep.subr.mxu0 0.0
    %1524 = vmatpush1.msra.mxu0 0.0
    %1525 = vmatprep.subr.mxu0 0.0
    %1526 = vmatpush1.msra.mxu0 0.0
    %1527 = vmatprep.subr.mxu0 0.0
    %1528 = vmatpush1.msra.mxu0 0.0
    %1529 = vmatprep.subr.mxu0 0.0
    %1530 = vmatpush1.msra.mxu0 0.0
    %1531 = vmatprep.subr.mxu0 0.0
    %1532 = vmatpush1.msra.mxu0 0.0
    %1533 = vmatprep.subr.mxu0 0.0
    %1534 = vmatpush1.msra.mxu0 0.0
    %1535 = vmatprep.subr.mxu0 0.0
    %1536 = vmatpush1.msra.mxu0 0.0
    %1537 = vmatprep.subr.mxu0 0.0
    %1538 = vmatpush1.msra.mxu0 0.0
    %1539 = vmatprep.subr.mxu0 0.0
    %1540 = vmatpush1.msra.mxu0 0.0
    %1541 = vmatprep.subr.mxu0 0.0
    %1542 = vmatpush1.msra.mxu0 0.0
    %1543 = vmatprep.subr.mxu0 0.0
    %1544 = vmatpush1.msra.mxu0 0.0
    %1545 = vmatprep.subr.mxu0 0.0
    %1546 = vmatpush1.msra.mxu0 0.0
    %1547 = vmatprep.subr.mxu0 0.0
    %1548 = vmatpush1.msra.mxu0 0.0
    %1549 = vmatprep.subr.mxu0 0.0
    %1550 = vmatpush1.msra.mxu0 0.0
    %1551 = vmatprep.subr.mxu0 0.0
    %1552 = vmatpush1.msra.mxu0 0.0
    %1553 = vmatprep.subr.mxu0 0.0
    %1554 = vmatpush1.msra.mxu0 0.0
    %1555 = vmatprep.subr.mxu0 0.0
    %1556 = vmatpush1.msra.mxu0 0.0
    %1557 = vmatprep.subr.mxu0 0.0
    %1558 = vmatpush1.msra.mxu0 0.0
    %1559 = vmatprep.subr.mxu0 0.0
    %1560 = vmatpush1.msra.mxu0 0.0
    %1561 = vmatprep.subr.mxu0 0.0
    %1562 = vmatpush1.msra.mxu0 0.0
    %1563 = vmatprep.subr.mxu0 0.0
    %1564 = vmatpush1.msra.mxu0 0.0
    %1565 = vmatprep.subr.mxu0 0.0
    %1566 = vmatpush1.msra.mxu0 0.0
    %1567 = vmatprep.subr.mxu0 0.0
    %1568 = vmatpush1.msra.mxu0 0.0
    %1569 = vmatprep.subr.mxu0 0.0
    %1570 = vmatpush1.msra.mxu0 0.0
    %1571 = vmatprep.subr.mxu0 0.0
    %1572 = vmatpush1.msra.mxu0 0.0
    %1573 = vmatprep.subr.mxu0 0.0
    %1574 = vmatpush1.msra.mxu0 0.0
    %1575 = vmatprep.mubr.f32.mxu0 0.0
    %1576 = vmatmul.mubr.f32.gmra.mrb[0].mxu0 %v1506
    %v1577 = vpop.f32.mrb[0].mxu0
    %v1578 = vadd.f32 0.0, %v1577
    %v1579 = vpop.f32.mrb[0].mxu0
    %1580 = vmatprep.mubr.f32.mxu0 0.0
    %1581 = vmatmul.mubr.f32.gmra.mrb[0].mxu0 %v1509
    %v1582 = vpop.f32.mrb[0].mxu0
    %v1583 = vadd.f32 0.0, %v1582
    %v1584 = vpop.f32.mrb[0].mxu0
    %1585 = vdwg.mxu0
    %v1587 = vsel %vm1131, %v1499, 0
    %v1590 = vsel %vm1131, %v1500, 0
    %1592 = vmatprep.subr.mxu0 0.0
    %1593 = vmatpush1.msra.mxu0 %v1501
    %1594 = vmatprep.subr.mxu0 0.0
    %1595 = vmatpush1.msra.mxu0 %v1502
    %1596 = vmatprep.subr.mxu0 0.0
    %1597 = vmatpush1.msra.mxu0 0.0
    %1598 = vmatprep.subr.mxu0 0.0
    %1599 = vmatpush1.msra.mxu0 0.0
    %1600 = vmatprep.subr.mxu0 0.0
    %1601 = vmatpush1.msra.mxu0 0.0
    %1602 = vmatprep.subr.mxu0 0.0
    %1603 = vmatpush1.msra.mxu0 0.0
    %1604 = vmatprep.subr.mxu0 0.0
    %1605 = vmatpush1.msra.mxu0 0.0
    %1606 = vmatprep.subr.mxu0 0.0
    %1607 = vmatpush1.msra.mxu0 0.0
    %1608 = vmatprep.subr.mxu0 0.0
    %1609 = vmatpush1.msra.mxu0 0.0
    %1610 = vmatprep.subr.mxu0 0.0
    %1611 = vmatpush1.msra.mxu0 0.0
    %1612 = vmatprep.subr.mxu0 0.0
    %1613 = vmatpush1.msra.mxu0 0.0
    %1614 = vmatprep.subr.mxu0 0.0
    %1615 = vmatpush1.msra.mxu0 0.0
    %1616 = vmatprep.subr.mxu0 0.0
    %1617 = vmatpush1.msra.mxu0 0.0
    %1618 = vmatprep.subr.mxu0 0.0
    %1619 = vmatpush1.msra.mxu0 0.0
    %1620 = vmatprep.subr.mxu0 0.0
    %1621 = vmatpush1.msra.mxu0 0.0
    %1622 = vmatprep.subr.mxu0 0.0
    %1623 = vmatpush1.msra.mxu0 0.0
    %1624 = vmatprep.subr.mxu0 0.0
    %1625 = vmatpush1.msra.mxu0 0.0
    %1626 = vmatprep.subr.mxu0 0.0
    %1627 = vmatpush1.msra.mxu0 0.0
    %1628 = vmatprep.subr.mxu0 0.0
    %1629 = vmatpush1.msra.mxu0 0.0
    %1630 = vmatprep.subr.mxu0 0.0
    %1631 = vmatpush1.msra.mxu0 0.0
    %1632 = vmatprep.subr.mxu0 0.0
    %1633 = vmatpush1.msra.mxu0 0.0
    %1634 = vmatprep.subr.mxu0 0.0
    %1635 = vmatpush1.msra.mxu0 0.0
    %1636 = vmatprep.subr.mxu0 0.0
    %1637 = vmatpush1.msra.mxu0 0.0
    %1638 = vmatprep.subr.mxu0 0.0
    %1639 = vmatpush1.msra.mxu0 0.0
    %1640 = vmatprep.subr.mxu0 0.0
    %1641 = vmatpush1.msra.mxu0 0.0
    %1642 = vmatprep.subr.mxu0 0.0
    %1643 = vmatpush1.msra.mxu0 0.0
    %1644 = vmatprep.subr.mxu0 0.0
    %1645 = vmatpush1.msra.mxu0 0.0
    %1646 = vmatprep.subr.mxu0 0.0
    %1647 = vmatpush1.msra.mxu0 0.0
    %1648 = vmatprep.subr.mxu0 0.0
    %1649 = vmatpush1.msra.mxu0 0.0
    %1650 = vmatprep.subr.mxu0 0.0
    %1651 = vmatpush1.msra.mxu0 0.0
    %1652 = vmatprep.subr.mxu0 0.0
    %1653 = vmatpush1.msra.mxu0 0.0
    %1654 = vmatprep.subr.mxu0 0.0
    %1655 = vmatpush1.msra.mxu0 0.0
    %1656 = vmatprep.mubr.f32.mxu0 0.0
    %1657 = vmatmul.mubr.f32.gmra.mrb[0].mxu0 %v1587
    %v1658 = vpop.f32.mrb[0].mxu0
    %v1659 = vadd.f32 %v1578, %v1658
    %v1660 = vpop.f32.mrb[0].mxu0
    %1661 = vmatprep.mubr.f32.mxu0 0.0
    %1662 = vmatmul.mubr.f32.gmra.mrb[0].mxu0 %v1590
    %v1663 = vpop.f32.mrb[0].mxu0
    %v1664 = vadd.f32 %v1583, %v1663
    %v1665 = vpop.f32.mrb[0].mxu0
    %1666 = vdwg.mxu0
    %v1667 = vld [vmem:[%s19] sm:$0x1]
    %v1669 = vlaneseq
    %v1670 = vshrl.u32 %v1669, 7
    %v1671 = vsub.s32 0, %v1670
    %v1672 = vrot.slane %v1667, %v1671
    %v1674 = vadd.f32 %v1659, %v1672
    %v1675 = vadd.f32 %v1664, %v1672
    %v1676 = vmax.f32 %v1674, 0.0
    %v1677 = vmax.f32 %v1675, 0.0
    %v1678 = vld [vmem:[%s20] sm:$0xff]
    %v1679 = vld [vmem:[%s20 + $0x8] sm:$0xff]
    %v1680 = vld [vmem:[%s20 + $0x10] sm:$0xff]
    %v1681 = vld [vmem:[%s20 + $0x18] sm:$0xff]
    %v1682 = vld [vmem:[%s21] sm:$0x1]
    %v1684 = vlaneseq
    %v1685 = vshrl.u32 %v1684, 7
    %v1686 = vsub.s32 0, %v1685
    %v1687 = vrot.slane %v1682, %v1686
    %v1690 = vsel %vm1415, %v1676, 0
    %v1693 = vsel %vm1415, %v1677, 0
    %1695 = vmatprep.subr.mxu0 0.0
    %1696 = vmatpush1.msra.mxu0 %v1678
    %1697 = vmatprep.subr.mxu0 0.0
    %1698 = vmatpush1.msra.mxu0 %v1679
    %1699 = vmatprep.subr.mxu0 0.0
    %1700 = vmatpush1.msra.mxu0 %v1680
    %1701 = vmatprep.subr.mxu0 0.0
    %1702 = vmatpush1.msra.mxu0 %v1681
    %1703 = vmatprep.subr.mxu0 0.0
    %1704 = vmatpush1.msra.mxu0 0.0
    %1705 = vmatprep.subr.mxu0 0.0
    %1706 = vmatpush1.msra.mxu0 0.0
    %1707 = vmatprep.subr.mxu0 0.0
    %1708 = vmatpush1.msra.mxu0 0.0
    %1709 = vmatprep.subr.mxu0 0.0
    %1710 = vmatpush1.msra.mxu0 0.0
    %1711 = vmatprep.subr.mxu0 0.0
    %1712 = vmatpush1.msra.mxu0 0.0
    %1713 = vmatprep.subr.mxu0 0.0
    %1714 = vmatpush1.msra.mxu0 0.0
    %1715 = vmatprep.subr.mxu0 0.0
    %1716 = vmatpush1.msra.mxu0 0.0
    %1717 = vmatprep.subr.mxu0 0.0
    %1718 = vmatpush1.msra.mxu0 0.0
    %1719 = vmatprep.subr.mxu0 0.0
    %1720 = vmatpush1.msra.mxu0 0.0
    %1721 = vmatprep.subr.mxu0 0.0
    %1722 = vmatpush1.msra.mxu0 0.0
    %1723 = vmatprep.subr.mxu0 0.0
    %1724 = vmatpush1.msra.mxu0 0.0
    %1725 = vmatprep.subr.mxu0 0.0
    %1726 = vmatpush1.msra.mxu0 0.0
    %1727 = vmatprep.subr.mxu0 0.0
    %1728 = vmatpush1.msra.mxu0 0.0
    %1729 = vmatprep.subr.mxu0 0.0
    %1730 = vmatpush1.msra.mxu0 0.0
    %1731 = vmatprep.subr.mxu0 0.0
    %1732 = vmatpush1.msra.mxu0 0.0
    %1733 = vmatprep.subr.mxu0 0.0
    %1734 = vmatpush1.msra.mxu0 0.0
    %1735 = vmatprep.subr.mxu0 0.0
    %1736 = vmatpush1.msra.mxu0 0.0
    %1737 = vmatprep.subr.mxu0 0.0
    %1738 = vmatpush1.msra.mxu0 0.0
    %1739 = vmatprep.subr.mxu0 0.0
    %1740 = vmatpush1.msra.mxu0 0.0
    %1741 = vmatprep.subr.mxu0 0.0
    %1742 = vmatpush1.msra.mxu0 0.0
    %1743 = vmatprep.subr.mxu0 0.0
    %1744 = vmatpush1.msra.mxu0 0.0
    %1745 = vmatprep.subr.mxu0 0.0
    %1746 = vmatpush1.msra.mxu0 0.0
    %1747 = vmatprep.subr.mxu0 0.0
    %1748 = vmatpush1.msra.mxu0 0.0
    %1749 = vmatprep.subr.mxu0 0.0
    %1750 = vmatpush1.msra.mxu0 0.0
    %1751 = vmatprep.subr.mxu0 0.0
    %1752 = vmatpush1.msra.mxu0 0.0
    %1753 = vmatprep.subr.mxu0 0.0
    %1754 = vmatpush1.msra.mxu0 0.0
    %1755 = vmatprep.subr.mxu0 0.0
    %1756 = vmatpush1.msra.mxu0 0.0
    %1757 = vmatprep.subr.mxu0 0.0
    %1758 = vmatpush1.msra.mxu0 0.0
    %1759 = vmatprep.mubr.f32.mxu0 0.0
    %1760 = vmatmul.mubr.f32.gmra.mrb[0].mxu0 %v1690
    %v1761 = vpop.f32.mrb[0].mxu0
    %v1762 = vadd.f32 %v1687, %v1761
    %v1763 = vpop.f32.mrb[0].mxu0
    %1764 = vmatprep.mubr.f32.mxu0 0.0
    %1765 = vmatmul.mubr.f32.gmra.mrb[0].mxu0 %v1693
    %v1766 = vpop.f32.mrb[0].mxu0
    %v1767 = vadd.f32 %v1687, %v1766
    %v1768 = vpop.f32.mrb[0].mxu0
    %1769 = vdwg.mxu0
    %v1770 = vmax.f32 %v1762, 0.0
    %v1771 = vmax.f32 %v1767, 0.0
    %v1772 = vld [vmem:[%s22] sm:$0x1]
    %v1774 = vlaneseq
    %v1775 = vshrl.u32 %v1774, 7
    %v1776 = vsub.s32 0, %v1775
    %v1777 = vrot.slane %v1772, %v1776
    %v1779 = vmul.f32 %v1497, %v1777
    %v1780 = vmul.f32 %v1498, %v1777
    %v1781 = vsel %vm1131, %v1779, 0.0
    %1782 = vadd.xlane.f32.xlu0 %v1781
    %v1783 = vpop.xlane.xlu0 %1782
    %v1784 = vsel %vm1131, %v1780, 0.0
    %1785 = vadd.xlane.f32.xlu0 %v1784
    %v1786 = vpop.xlane.xlu0 %1785
    %v1787 = vld [vmem:[%s23] sm:$0x1]
    %v1789 = vlaneseq
    %v1790 = vshrl.u32 %v1789, 7
    %v1791 = vsub.s32 0, %v1790
    %v1792 = vrot.slane %v1787, %v1791
    %v1794 = vmul.f32 %v1121, %v1792
    %v1795 = vmul.f32 %v1122, %v1792
    %vm1796 = vcmask 64512
    %v1797 = vsel %vm1796, %v1794, 0.0
    %1798 = vadd.xlane.f32.xlu0 %v1797
    %v1799 = vpop.xlane.xlu0 %1798
    %v1800 = vsel %vm1796, %v1795, 0.0
    %1801 = vadd.xlane.f32.xlu0 %v1800
    %v1802 = vpop.xlane.xlu0 %1801
    %v1803 = vadd.f32 %v1783, %v1799
    %v1804 = vadd.f32 %v1786, %v1802
    %v1805 = vld [vmem:[%s24] sm:$0x1]
    %v1807 = vlaneseq
    %v1808 = vshrl.u32 %v1807, 7
    %v1809 = vsub.s32 0, %v1808
    %v1810 = vrot.slane %v1805, %v1809
    %v1812 = vmul.f32 %v1770, %v1810
    %v1813 = vmul.f32 %v1771, %v1810
    %v1814 = vsel %vm1131, %v1812, 0.0
    %1815 = vadd.xlane.f32.xlu0 %v1814
    %v1816 = vpop.xlane.xlu0 %1815
    %v1817 = vsel %vm1131, %v1813, 0.0
    %1818 = vadd.xlane.f32.xlu0 %v1817
    %v1819 = vpop.xlane.xlu0 %1818
    %v1820 = vadd.f32 %v1803, %v1816
    %v1821 = vadd.f32 %v1804, %v1819
    %v1822 = vld [vmem:[#allocation2] sm:$0x1]
    %v1824 = vlaneseq
    %v1825 = vshrl.u32 %v1824, 7
    %v1826 = vsub.s32 0, %v1825
    %v1827 = vrot.slane %v1822, %v1826
    %v1829 = vadd.f32 %v1820, %v1827
    %v1830 = vadd.f32 %v1821, %v1827
    %v1831 = vsub.f32 0.0, %v1829
    %v1832 = vsub.f32 0.0, %v1830
    %v1833 = vmul.f32 %v1831, 1.442695
    %v1834 = vpow.pop %v1833
    %v1835 = vmul.f32 %v1832, 1.442695
    %v1836 = vpow.pop %v1835
    %v1837 = vadd.f32 %v1834, 1.0
    %v1838 = vadd.f32 %v1836, 1.0
    %v1839 = vrcp.pop %v1837
    %v1840 = vmul.f32 1.0, %v1839
    %v1841 = vrcp.pop %v1838
    %v1842 = vmul.f32 1.0, %v1841
    %vm1843 = vcmask 7168
    %1844 = vst.msk [vmem:[%s26] sm:$0xff] %vm1843, %v1840
    %1845 = vst.msk [vmem:[%s26 + $0x8] sm:$0xff] %vm1843, %v1842
    // Predicated region
    $region118: #{tpu_custom_call.1} parent=1 // pred_check
      _
    $region119: #{tpu_custom_call.1} parent=1 // pred_check_branch
      %1847 = sbr.rel (0) target = $region121
    $region120: #{tpu_custom_call.1} parent=1 // pred_region
      _
    $region121: #{tpu_custom_call.1} parent=1 // pred_fallthru
      _
    // Predicated region
    $region122: #{tpu_custom_call.1} parent=1 // pred_check
      _
    $region123: #{tpu_custom_call.1} parent=1 // pred_check_branch
      %1849 = sbr.rel (0) target = $region125
    $region124: #{tpu_custom_call.1} parent=1 // pred_region
      _
    $region125: #{tpu_custom_call.1} parent=1 // pred_fallthru
      _
    %1850 = vsyncpa [#allocation4], 1
    %1851 = vsyncpa [#allocation6], 1

</llo_original>
